<compile_context>
chip_gen: v7x
topology: tpu7x:2x2x1
jax: 0.10.0
libtpu: 0.0.40
codegen_flags: <defaults>
</compile_context>

<pallas_src>
import functools

import jax
import jax.numpy as jnp
from jax.experimental import pallas as pl
from jax.experimental.pallas import tpu as pltpu

BN_EPS = 1e-5
NEG_SLOPE = 0.1      # nn.LeakyReLU(0.1)
LANE = 128


def _round_up(x, m):
    return (x + m - 1) // m * m


def _pick_toh(oh, ow, max_m=512):
    """Largest divisor of OH keeping the GEMM M = TOH*OW at or below max_m."""
    best = 1
    for d in range(1, oh + 1):
        if oh % d == 0 and d * ow <= max_m:
            best = d
    return best


# ----------------------------------------------------------------------------
# Pallas kernel: kh MXU dots of (TOH*OW, K128) x (K128, TN) + bias + LeakyReLU
# ----------------------------------------------------------------------------
def _conv_block_kernel(x_ref, w_ref, b_ref, o_ref, *, kh, stride, toh, ow):
    """
    x_ref: (s, RH*OW, K128)  bf16  width-im2col'd, row-phase-decomposed input
    w_ref: (kh, K128, TN)    bf16  BN-scale-folded conv weights
    b_ref: (1, TN)           f32   folded bias (conv bias + BN shift)
    o_ref: (TOH*OW, TN)      bf16  flattened NHWC output tile (lane-dense)
    """
    oh0 = pl.program_id(1) * toh          # first output row of this OH tile
    m = toh * ow

    def tap_lhs(ki):
        phase = ki % stride               # static (Python int)
        row0 = oh0 + ki // stride         # dynamic scalar
        start = pl.multiple_of(row0 * ow, ow)
        return x_ref[phase, pl.ds(start, m), :]          # (M, K128) bf16

    # First tap initializes the accumulator (no zero-fill + add).
    acc = jnp.dot(tap_lhs(0), w_ref[0], preferred_element_type=jnp.float32)
    for ki in range(1, kh):
        acc += jnp.dot(tap_lhs(ki), w_ref[ki],
                       preferred_element_type=jnp.float32)

    # f32 epilogue, executed once per tile: folded-BN bias + LeakyReLU(0.1).
    y = acc + b_ref[...]
    y = jnp.where(y >= 0.0, y, NEG_SLOPE * y)
    o_ref[...] = y.astype(o_ref.dtype)


# ----------------------------------------------------------------------------
# Wrapper: ConvBlock2d forward (PyTorch NCHW in / NCHW bf16 out)
# ----------------------------------------------------------------------------
def conv_block_2d(x_nchw, params, *, stride, padding):
    w = params['w']                                   # (Cout, Cin, KH, KW) f32
    cout, cin, kh, kw = w.shape
    n, cin_x, h, w_in = x_nchw.shape
    assert cin_x == cin
    s, p = int(stride), int(padding)
    oh = (h + 2 * p - kh) // s + 1
    ow = (w_in + 2 * p - kw) // s + 1

    # ---- fold eval-mode BatchNorm + conv bias into one weight/bias pair ----
    scale = params['gamma'] / jnp.sqrt(params['rvar'] + BN_EPS)          # (Cout,)
    w_f = w * scale[:, None, None, None]
    b_f = (params['b_conv'] - params['rmean']) * scale + params['beta']

    # ---- activations: cast to bf16 FIRST, then NCHW->NHWC + spatial pad ----
    x = jnp.transpose(x_nchw.astype(jnp.bfloat16), (0, 2, 3, 1))
    xp = jnp.pad(x, ((0, 0), (p, p), (p, p), (0, 0)))        # (N, Hp, Wp, Cin)
    hp = h + 2 * p

    # ---- width im2col: pack (kw, Cin) into the lane dim, zero-pad to 128 ----
    k_raw = kw * cin
    k128 = _round_up(k_raw, LANE)
    cols = [xp[:, :, kj: kj + (ow - 1) * s + 1: s, :] for kj in range(kw)]
    xw = jnp.stack(cols, axis=3).reshape(n, hp, ow, k_raw)
    xw = jnp.pad(xw, ((0, 0), (0, 0), (0, 0), (0, k128 - k_raw)))

    # ---- row-phase decomposition (absorbs the height stride) ----
    rh = oh + (kh - 1) // s                    # rows needed per phase
    phases = []
    for ph in range(s):
        v = xw[:, ph::s, :, :][:, :rh]
        v = jnp.pad(v, ((0, 0), (0, rh - v.shape[1]), (0, 0), (0, 0)))
        phases.append(v)
    xph = jnp.stack(phases, axis=1).reshape(n, s, rh * ow, k128)   # bf16

    # ---- weights -> (kh, K128, Cout_p) bf16, bias -> (1, Cout_p) f32 ----
    cout_p = _round_up(cout, LANE)
    tn = LANE            # 128: v5e MXU width; >=2 parallel blocks for v7x
    wm = jnp.transpose(w_f, (2, 3, 1, 0)).reshape(kh, k_raw, cout)
    wm = jnp.pad(wm, ((0, 0), (0, k128 - k_raw),
                      (0, cout_p - cout))).astype(jnp.bfloat16)
    bm = jnp.pad(b_f.astype(jnp.float32), (0, cout_p - cout)).reshape(1, cout_p)

    # ---- tiling / grid: (batch, OH tiles, Cout tiles), Cout innermost ----
    toh = _pick_toh(oh, ow)
    if (toh * ow) % 8 != 0 and toh != oh:
        toh = oh                               # keep out block sublane-aligned
    grid = (n, oh // toh, cout_p // tn)

    # VMEM budget from the actual block sizes (x2 double-buffering), v7x-safe.
    x_bytes = s * rh * ow * k128 * 2
    w_bytes = kh * k128 * tn * 2
    o_bytes = toh * ow * tn * 2
    vmem_need = 2 * (x_bytes + w_bytes + tn * 4 + o_bytes) + (2 << 20)
    vmem_limit = int(min(max(vmem_need, 16 << 20), 48 << 20))

    flops = 2 * n * oh * ow * kh * kw * cin * cout
    bytes_accessed = int(xph.size * 2 + wm.size * 2 + bm.size * 4
                         + n * oh * ow * cout_p * 2)

    kernel = functools.partial(_conv_block_kernel, kh=kh, stride=s,
                               toh=toh, ow=ow)
    out = pl.pallas_call(
        kernel,
        out_shape=jax.ShapeDtypeStruct((n, oh * ow, cout_p), jnp.bfloat16),
        grid=grid,
        in_specs=[
            # x block index is constant along the OH-tile and Cout axes, so its
            # DMA happens once per batch element and is skipped afterwards.
            pl.BlockSpec((None, s, rh * ow, k128), lambda i, t, j: (i, 0, 0, 0)),
            pl.BlockSpec((kh, k128, tn), lambda i, t, j: (0, 0, j)),
            pl.BlockSpec((1, tn), lambda i, t, j: (0, j)),
        ],
        out_specs=pl.BlockSpec((None, toh * ow, tn), lambda i, t, j: (i, t, j)),
        compiler_params=pltpu.CompilerParams(
            dimension_semantics=("parallel", "parallel", "arbitrary"),
            vmem_limit_bytes=vmem_limit),
        cost_estimate=pl.CostEstimate(flops=flops, transcendentals=0,
                                      bytes_accessed=bytes_accessed),
    )(xph, wm, bm)

    # Boundary relayout only: drop Cout lane padding, NHWC -> NCHW.
    out = out.reshape(n, oh, ow, cout_p)[:, :, :, :cout]
    return jnp.transpose(out, (0, 3, 1, 2))


# ----------------------------------------------------------------------------
# Deterministic synthetic parameters + pure-JAX reference for validation
# ----------------------------------------------------------------------------
def init_conv_block_params(key, cin, cout, k):
    k1, k2, k3, k4, k5, k6 = jax.random.split(key, 6)
    fan_in = cin * k * k
    w = jax.random.normal(k1, (cout, cin, k, k), jnp.float32) * (2.0 / fan_in) ** 0.5
    bound = 1.0 / fan_in ** 0.5
    b_conv = jax.random.uniform(k2, (cout,), jnp.float32, -bound, bound)
    gamma = 1.0 + 0.1 * jax.random.normal(k3, (cout,), jnp.float32)
    beta = 0.1 * jax.random.normal(k4, (cout,), jnp.float32)
    rmean = 0.1 * jax.random.normal(k5, (cout,), jnp.float32)
    rvar = 1.0 + 0.1 * jnp.abs(jax.random.normal(k6, (cout,), jnp.float32))
    return dict(w=w, b_conv=b_conv, gamma=gamma, beta=beta, rmean=rmean, rvar=rvar)


def conv_block_2d_reference(x_nchw, params, *, stride, padding):
    y = jax.lax.conv_general_dilated(
        x_nchw.astype(jnp.float32), params['w'],
        window_strides=(stride, stride),
        padding=[(padding, padding), (padding, padding)],
        dimension_numbers=('NCHW', 'OIHW', 'NCHW'),
        precision=jax.lax.Precision.HIGHEST)
    y = y + params['b_conv'][None, :, None, None]
    scale = params['gamma'] / jnp.sqrt(params['rvar'] + BN_EPS)
    y = (y - params['rmean'][None, :, None, None]) * scale[None, :, None, None] \
        + params['beta'][None, :, None, None]
    return jnp.where(y >= 0.0, y, NEG_SLOPE * y)


if __name__ == "__main__":
    key = jax.random.PRNGKey(0)
    configs = [
        # in_channel, out_channel, ker_size, padd, stride, H, W
        dict(cin=8,  cout=64, k=3, pad=1, stride=1, h=16, w=16),
        dict(cin=16, cout=32, k=5, pad=2, stride=2, h=16, w=16),
    ]
    for cfg in configs:
        key, pkey, xkey = jax.random.split(key, 3)
        params = init_conv_block_params(pkey, cfg['cin'], cfg['cout'], cfg['k'])
        x = jax.random.normal(xkey, (2, cfg['cin'], cfg['h'], cfg['w']), jnp.float32)

        out = conv_block_2d(x, params, stride=cfg['stride'], padding=cfg['pad'])
        out = jax.block_until_ready(out)

        oh = (cfg['h'] + 2 * cfg['pad'] - cfg['k']) // cfg['stride'] + 1
        ow = (cfg['w'] + 2 * cfg['pad'] - cfg['k']) // cfg['stride'] + 1
        assert out.shape == (2, cfg['cout'], oh, ow)
        assert out.dtype == jnp.bfloat16
        out_f32 = out.astype(jnp.float32)
        assert bool(jnp.all(jnp.isfinite(out_f32)))

        ref = conv_block_2d_reference(x, params, stride=cfg['stride'], padding=cfg['pad'])
        diff = jnp.abs(out_f32 - ref)
        max_err = float(jnp.max(diff))
        mean_err = float(jnp.mean(diff))
        # bf16 operands + bf16 output store (~2^-8 relative rounding) vs f32 ref.
        assert max_err < 1.5e-1, f"max abs err {max_err}"
        assert mean_err < 1.5e-2, f"mean abs err {mean_err}"

    print("KERNEL_OK")
</pallas_src>

<mosaic_0001>
module attributes {stable_mosaic.version = 11 : i64} {
  func.func @_conv_block_kernel(%arg0: i32, %arg1: i32, %arg2: i32, %arg3: memref<1x1x288x128xbf16, #tpu.memory_space<vmem>>, %arg4: memref<3x128x128xbf16, #tpu.memory_space<vmem>>, %arg5: memref<1x128xf32, #tpu.memory_space<vmem>>, %arg6: memref<1x256x128xbf16, #tpu.memory_space<vmem>>) attributes {dimension_semantics = [#tpu.dimension_semantics<parallel>, #tpu.dimension_semantics<parallel>, #tpu.dimension_semantics<arbitrary>], iteration_bounds = array<i64: 2, 1, 1>, scalar_prefetch = 0 : i64, scratch_operands = 0 : i64, tpu.core_type = #tpu.core_type<tc>, window_params = [{transform_indices = @transform_0, window_bounds = array<i64: 1, 1, 288, 128>}, {transform_indices = @transform_1, window_bounds = array<i64: 3, 128, 128>}, {transform_indices = @transform_2, window_bounds = array<i64: 1, 128>}, {transform_indices = @transform_3, window_bounds = array<i64: 1, 256, 128>}]} {
    %c16_i32 = arith.constant 16 : i32
    %0 = arith.muli %arg1, %c16_i32 : i32
    %c0_i32 = arith.constant 0 : i32
    %1 = arith.addi %0, %c0_i32 : i32
    %c16_i32_0 = arith.constant 16 : i32
    %2 = arith.muli %1, %c16_i32_0 : i32
    %3 = tpu.assume_multiple %2, 16 : i32
    %c0 = arith.constant 0 : index
    %c0_1 = arith.constant 0 : index
    %4 = arith.index_cast %3 : i32 to index
    %c0_2 = arith.constant 0 : index
    %5 = vector.load %arg3[%c0, %c0_1, %4, %c0_2] : memref<1x1x288x128xbf16, #tpu.memory_space<vmem>>, vector<1x1x256x128xbf16>
    %6 = vector.shape_cast %5 : vector<1x1x256x128xbf16> to vector<256x128xbf16>
    %c0_3 = arith.constant 0 : index
    %c0_4 = arith.constant 0 : index
    %c0_5 = arith.constant 0 : index
    %7 = vector.load %arg4[%c0_3, %c0_4, %c0_5] : memref<3x128x128xbf16, #tpu.memory_space<vmem>>, vector<1x128x128xbf16>
    %8 = vector.shape_cast %7 : vector<1x128x128xbf16> to vector<128x128xbf16>
    %cst = arith.constant dense<0.000000e+00> : vector<256x128xf32>
    %9 = tpu.matmul %6, %8, %cst {dimension_numbers = #tpu.dot_dimension_numbers<[1], [0], [0], [1], [0, 0, 1, 1], [], []>} : vector<256x128xbf16>, vector<128x128xbf16>, vector<256x128xf32> -> vector<256x128xf32>
    %c1_i32 = arith.constant 1 : i32
    %10 = arith.addi %0, %c1_i32 : i32
    %c16_i32_6 = arith.constant 16 : i32
    %11 = arith.muli %10, %c16_i32_6 : i32
    %12 = tpu.assume_multiple %11, 16 : i32
    %c0_7 = arith.constant 0 : index
    %c0_8 = arith.constant 0 : index
    %13 = arith.index_cast %12 : i32 to index
    %c0_9 = arith.constant 0 : index
    %14 = vector.load %arg3[%c0_7, %c0_8, %13, %c0_9] : memref<1x1x288x128xbf16, #tpu.memory_space<vmem>>, vector<1x1x256x128xbf16>
    %15 = vector.shape_cast %14 : vector<1x1x256x128xbf16> to vector<256x128xbf16>
    %c1 = arith.constant 1 : index
    %c0_10 = arith.constant 0 : index
    %c0_11 = arith.constant 0 : index
    %16 = vector.load %arg4[%c1, %c0_10, %c0_11] : memref<3x128x128xbf16, #tpu.memory_space<vmem>>, vector<1x128x128xbf16>
    %17 = vector.shape_cast %16 : vector<1x128x128xbf16> to vector<128x128xbf16>
    %cst_12 = arith.constant dense<0.000000e+00> : vector<256x128xf32>
    %18 = tpu.matmul %15, %17, %cst_12 {dimension_numbers = #tpu.dot_dimension_numbers<[1], [0], [0], [1], [0, 0, 1, 1], [], []>} : vector<256x128xbf16>, vector<128x128xbf16>, vector<256x128xf32> -> vector<256x128xf32>
    %19 = arith.addf %9, %18 : vector<256x128xf32>
    %c2_i32 = arith.constant 2 : i32
    %20 = arith.addi %0, %c2_i32 : i32
    %c16_i32_13 = arith.constant 16 : i32
    %21 = arith.muli %20, %c16_i32_13 : i32
    %22 = tpu.assume_multiple %21, 16 : i32
    %c0_14 = arith.constant 0 : index
    %c0_15 = arith.constant 0 : index
    %23 = arith.index_cast %22 : i32 to index
    %c0_16 = arith.constant 0 : index
    %24 = vector.load %arg3[%c0_14, %c0_15, %23, %c0_16] : memref<1x1x288x128xbf16, #tpu.memory_space<vmem>>, vector<1x1x256x128xbf16>
    %25 = vector.shape_cast %24 : vector<1x1x256x128xbf16> to vector<256x128xbf16>
    %c2 = arith.constant 2 : index
    %c0_17 = arith.constant 0 : index
    %c0_18 = arith.constant 0 : index
    %26 = vector.load %arg4[%c2, %c0_17, %c0_18] : memref<3x128x128xbf16, #tpu.memory_space<vmem>>, vector<1x128x128xbf16>
    %27 = vector.shape_cast %26 : vector<1x128x128xbf16> to vector<128x128xbf16>
    %cst_19 = arith.constant dense<0.000000e+00> : vector<256x128xf32>
    %28 = tpu.matmul %25, %27, %cst_19 {dimension_numbers = #tpu.dot_dimension_numbers<[1], [0], [0], [1], [0, 0, 1, 1], [], []>} : vector<256x128xbf16>, vector<128x128xbf16>, vector<256x128xf32> -> vector<256x128xf32>
    %29 = arith.addf %19, %28 : vector<256x128xf32>
    %c0_20 = arith.constant 0 : index
    %c0_21 = arith.constant 0 : index
    %30 = vector.load %arg5[%c0_20, %c0_21] : memref<1x128xf32, #tpu.memory_space<vmem>>, vector<1x128xf32>
    %31 = vector.broadcast %30 : vector<1x128xf32> to vector<256x128xf32>
    %32 = arith.addf %29, %31 : vector<256x128xf32>
    %cst_22 = arith.constant 0.000000e+00 : f32
    %33 = vector.broadcast %cst_22 : f32 to vector<256x128xf32>
    %34 = arith.cmpf oge, %32, %33 : vector<256x128xf32>
    %cst_23 = arith.constant 1.000000e-01 : f32
    %35 = vector.broadcast %cst_23 : f32 to vector<256x128xf32>
    %36 = arith.mulf %35, %32 : vector<256x128xf32>
    %37 = arith.select %34, %32, %36 : vector<256x128xi1>, vector<256x128xf32>
    %38 = arith.truncf %37 : vector<256x128xf32> to vector<256x128xbf16>
    %c0_24 = arith.constant 0 : index
    %c0_25 = arith.constant 0 : index
    %c0_26 = arith.constant 0 : index
    %39 = vector.load %arg6[%c0_24, %c0_25, %c0_26] : memref<1x256x128xbf16, #tpu.memory_space<vmem>>, vector<1x256x128xbf16>
    %40 = vector.shape_cast %39 : vector<1x256x128xbf16> to vector<256x128xbf16>
    %41 = vector.shape_cast %38 : vector<256x128xbf16> to vector<1x256x128xbf16>
    tpu.vector_store %arg6[%c0_24, %c0_25, %c0_26], %41 {strides = array<i32>} : memref<1x256x128xbf16, #tpu.memory_space<vmem>>, vector<1x256x128xbf16>,
    return
  }
  func.func @transform_0(%arg0: i32, %arg1: i32, %arg2: i32) -> (i32, i32, i32, i32) {
    %c0_i32 = arith.constant 0 : i32
    %c0_i32_0 = arith.constant 0 : i32
    %c0_i32_1 = arith.constant 0 : i32
    %c0_i32_2 = arith.constant 0 : i32
    return %arg0, %c0_i32, %c0_i32_0, %c0_i32_1 : i32, i32, i32, i32
  }
  func.func @transform_1(%arg0: i32, %arg1: i32, %arg2: i32) -> (i32, i32, i32) {
    %c0_i32 = arith.constant 0 : i32
    %c0_i32_0 = arith.constant 0 : i32
    %c0_i32_1 = arith.constant 0 : i32
    return %c0_i32, %c0_i32_0, %arg2 : i32, i32, i32
  }
  func.func @transform_2(%arg0: i32, %arg1: i32, %arg2: i32) -> (i32, i32) {
    %c0_i32 = arith.constant 0 : i32
    %c0_i32_0 = arith.constant 0 : i32
    return %c0_i32, %arg2 : i32, i32
  }
  func.func @transform_3(%arg0: i32, %arg1: i32, %arg2: i32) -> (i32, i32, i32) {
    %c0_i32 = arith.constant 0 : i32
    return %arg0, %arg1, %arg2 : i32, i32, i32
  }
}

</mosaic_0001>

<llo_original>
// kernel: tpu_custom_call.1
$region0: #{tpu_custom_call.1}
  #allocation0 [shape = 'u32[]', space=smem, size = 0x4, offset = 0x4, fixed_abs, tag = 'smem constant byte address 0x4 - core index']
  #allocation1 [shape = 'u32[144,128]{1,0:T(1,128)}', space=vmem, size = 0x12000, scoped, tag = 'internal scratch']
  %s0 = inlined_call_operand.hbm [shape: bf16[2,1,288,128], index: 0, kind: input, shape index: {}]
  %s1 = inlined_call_operand.hbm [shape: bf16[3,128,128], index: 1, kind: input, shape index: {}]
  %s2 = inlined_call_operand.vmem [shape: f32[1,128], index: 2, kind: input, shape index: {}]
  %s3 = inlined_call_operand.hbm [shape: bf16[2,256,128], index: 3, kind: output, shape index: {}]
  %s4 = sld [smem:[#allocation0]]
  $region53: #{tpu_custom_call.1} parent=0
    _
  %s6 = ssub.s32 1, %s4
  %s7 = scalar_select 0, %s6, %s4
  $region1: #{tpu_custom_call.1} parent=0
    #allocation2 [shape = 'u8[147456]{0}', space=vmem, size = 0x24000, scoped, tag = 'input window, operand 0']
    #allocation3 [shape = 's32[2]{0}', space=sflag, size = 0x8, scoped, tag = 'scoped memory for tpu_custom_call.1']
    #allocation4 [shape = 's32[2]{0}', space=sflag, size = 0x8, scoped, tag = 'scoped memory for tpu_custom_call.1']
    #allocation5 [shape = 'u8[98304]{0}', space=vmem, size = 0x18000, scoped, tag = 'input window, operand 1, single buffered']
    #allocation6 [shape = 's32[1]{0}', space=sflag, size = 0x4, scoped, tag = 'scoped memory for tpu_custom_call.1']
    #allocation7 [shape = 'u8[131072]{0}', space=vmem, size = 0x20000, scoped, tag = 'output window, operand 0']
    %8 = vsyncpa [#allocation3], 0
    %s9 = scalar_lea.sflag [#allocation3], 1
    %10 = vsyncpa %s9, 0
    %11 = vsyncpa [#allocation6], 0
    %12 = vsyncpa [#allocation4], 0
    %s13 = scalar_lea.sflag [#allocation4], 1
    %14 = vsyncpa %s13, 0
    loop: start=0, step=1, limit=4
    $region2: #{tpu_custom_call.1} parent=1 // loop_pre_header
      _
    $region3: #{tpu_custom_call.1} parent=1 // loop_header
      %s16 = sphi 0, %s20
      %p17 = scmp.ge.s32.totalorder %s16, 4
      %s23 = sphi 0, %s42
      %s24 = sphi 0, %s38
      %s25 = sphi 0, %s34
      %s26 = sphi 0, %s23
      %s27 = sphi 0, %s24
      %s28 = sphi 0, %s25
      %s29 = sphi 0, %s26
      %s30 = sphi 0, %s27
      %s31 = sphi 0, %s28
      %s45 = sphi 0, %s47
      %s48 = sphi 0, %s45
      %s49 = sphi 0, %s48
      %s65 = sphi 0, %s49
      %s71 = sphi 0, %s73
      %s74 = sphi 0, %s71
      %s75 = sphi 0, %s74
      %s91 = sphi 0, %s75
      %s97 = sphi 0, %s99
      %s100 = sphi 0, %s97
      %s101 = sphi 0, %s100
      %s117 = sphi 0, %s101
      %s127 = sphi 0, %s129
      %s130 = sphi 0, %s127
      %s131 = sphi 0, %s130
      %s147 = sphi 0, %s131
    $region4: #{tpu_custom_call.1} parent=1 // loop_header_branch
      %19 = sbr.rel (%p17) target = $region8
    $region5: #{tpu_custom_call.1} parent=1 // loop_body
      %s21 = ssub.s32 %s16, 1
      %s22 = ssub.s32 %s16, 2
      %s32 = sadd.s32 1, %s25
      %p33 = scmp.ge.s32.totalorder %s32, 1
      %s34 = scalar_select %p33, 0, %s32
      %s35 = sadd.s32 1, %s24
      %s36 = scalar_select %p33, %s35, %s24
      %p37 = scmp.ge.s32.totalorder %s36, 1
      %s38 = scalar_select %p37, 0, %s36
      %s39 = sadd.s32 1, %s23
      %s40 = scalar_select %p37, %s39, %s23
      %p41 = scmp.ge.s32.totalorder %s40, 2
      %s42 = scalar_select %p41, 0, %s40
      %s43 = ssub.s32 %s23, %s42
      %p44 = scmp.eq.s32.totalorder %s43, 0
      %s46 = sadd.s32 %s45, 1
      %s47 = scalar_select %p44, %s45, %s46
      %p50 = pneg %p44
      %p51 = scmp.eq.s32.totalorder %s16, 1
      %p52 = por %p50, %p51
      %p53 = scmp.ne.s32.totalorder %s45, %s48
      %p54 = scmp.eq.s32.totalorder %s16, 0
      %p55 = por %p53, %p54
      %p56 = scmp.ne.s32.totalorder %s45, %s48
      %p57 = scmp.eq.s32.totalorder %s21, 1
      %p58 = por %p56, %p57
      %p59 = scmp.ne.s32.totalorder %s48, %s49
      %p60 = scmp.eq.s32.totalorder %s21, 0
      %p61 = por %p59, %p60
      %p62 = scmp.ne.s32.totalorder %s48, %s49
      %p63 = scmp.eq.s32.totalorder %s22, 1
      %p64 = por %p62, %p63
      %p66 = scmp.ne.s32.totalorder %s49, %s65
      %p67 = scmp.eq.s32.totalorder %s22, 0
      %p68 = por %p66, %p67
      %s69 = ssub.s32 %s25, %s34
      %p70 = scmp.eq.s32.totalorder %s69, 0
      %s72 = sadd.s32 %s71, 1
      %s73 = scalar_select %p70, %s71, %s72
      %p76 = pneg %p70
      %p77 = scmp.eq.s32.totalorder %s16, 1
      %p78 = por %p76, %p77
      %p79 = scmp.ne.s32.totalorder %s71, %s74
      %p80 = scmp.eq.s32.totalorder %s16, 0
      %p81 = por %p79, %p80
      %p82 = scmp.ne.s32.totalorder %s71, %s74
      %p83 = scmp.eq.s32.totalorder %s21, 1
      %p84 = por %p82, %p83
      %p85 = scmp.ne.s32.totalorder %s74, %s75
      %p86 = scmp.eq.s32.totalorder %s21, 0
      %p87 = por %p85, %p86
      %p88 = scmp.ne.s32.totalorder %s74, %s75
      %p89 = scmp.eq.s32.totalorder %s22, 1
      %p90 = por %p88, %p89
      %p92 = scmp.ne.s32.totalorder %s75, %s91
      %p93 = scmp.eq.s32.totalorder %s22, 0
      %p94 = por %p92, %p93
      %s95 = ssub.s32 %s25, %s34
      %p96 = scmp.eq.s32.totalorder %s95, 0
      %s98 = sadd.s32 %s97, 1
      %s99 = scalar_select %p96, %s97, %s98
      %p102 = pneg %p96
      %p103 = scmp.eq.s32.totalorder %s16, 1
      %p104 = por %p102, %p103
      %p105 = scmp.ne.s32.totalorder %s97, %s100
      %p106 = scmp.eq.s32.totalorder %s16, 0
      %p107 = por %p105, %p106
      %p108 = scmp.ne.s32.totalorder %s97, %s100
      %p109 = scmp.eq.s32.totalorder %s21, 1
      %p110 = por %p108, %p109
      %p111 = scmp.ne.s32.totalorder %s100, %s101
      %p112 = scmp.eq.s32.totalorder %s21, 0
      %p113 = por %p111, %p112
      %p114 = scmp.ne.s32.totalorder %s100, %s101
      %p115 = scmp.eq.s32.totalorder %s22, 1
      %p116 = por %p114, %p115
      %p118 = scmp.ne.s32.totalorder %s101, %s117
      %p119 = scmp.eq.s32.totalorder %s22, 0
      %p120 = por %p118, %p119
      %s121 = ssub.s32 %s23, %s42
      %s122 = ssub.s32 %s24, %s38
      %s123 = sor.u32 %s121, %s122
      %s124 = ssub.s32 %s25, %s34
      %s125 = sor.u32 %s123, %s124
      %p126 = scmp.eq.s32.totalorder %s125, 0
      %s128 = sadd.s32 %s127, 1
      %s129 = scalar_select %p126, %s127, %s128
      %p132 = pneg %p126
      %p133 = scmp.eq.s32.totalorder %s16, 1
      %p134 = por %p132, %p133
      %p135 = scmp.ne.s32.totalorder %s127, %s130
      %p136 = scmp.eq.s32.totalorder %s16, 0
      %p137 = por %p135, %p136
      %p138 = scmp.ne.s32.totalorder %s127, %s130
      %p139 = scmp.eq.s32.totalorder %s21, 1
      %p140 = por %p138, %p139
      %p141 = scmp.ne.s32.totalorder %s130, %s131
      %p142 = scmp.eq.s32.totalorder %s21, 0
      %p143 = por %p141, %p142
      %p144 = scmp.ne.s32.totalorder %s130, %s131
      %p145 = scmp.eq.s32.totalorder %s22, 1
      %p146 = por %p144, %p145
      %p148 = scmp.ne.s32.totalorder %s131, %s147
      %p149 = scmp.eq.s32.totalorder %s22, 0
      %p150 = por %p148, %p149
      %p151 = scmp.le.s32.totalorder 1, %s16
      %p152 = scmp.lt.s32.totalorder %s16, 3
      %p153 = pnand %p151, %p152
      %p154 = pneg %p153
      // Predicated region
      $region9: #{tpu_custom_call.1} parent=5 // pred_check
        _
      $region10: #{tpu_custom_call.1} parent=5 // pred_check_branch
        %156 = sbr.rel (%p153) target = $region12
      $region11: #{tpu_custom_call.1} parent=5 // pred_region
        %s157 = ssub.s32 %s16, 1
        // Predicated region
        $region13: #{tpu_custom_call.1} parent=11 // pred_check
          %p158 = pneg %p87
        $region14: #{tpu_custom_call.1} parent=11 // pred_check_branch
          %160 = sbr.rel (%p158) target = $region16
        $region15: #{tpu_custom_call.1} parent=11 // pred_region
          %s162 = ssub.s32 3072, 3072
          %163 = vsyncadd [#allocation6], %s162
          %s164 = smul.addr %s28, 64
          %s165 = scalar_lea.hbm %s1, %s164
          %s166 = sshll.u32 [#allocation5], 4
          %s167 = int_to_ptr.vmem [resolvable:$true] %s166
          %172 = dma.hbm_to_vmem [thread:$0]  %s165, 3072, %s167, [#allocation6], 64, 64, 4
        $region16: #{tpu_custom_call.1} parent=11 // pred_fallthru
          _
        // Predicated region
        $region17: #{tpu_custom_call.1} parent=11 // pred_check
          %p173 = pneg %p113
        $region18: #{tpu_custom_call.1} parent=11 // pred_check_branch
          %175 = sbr.rel (%p173) target = $region20
        $region19: #{tpu_custom_call.1} parent=11 // pred_region
          %p176 = scmp.lt.s32.totalorder %s28, 0
          %s177 = scalar_select %p176, %s28, 0
          %s178 = scalar_lea.vmem %s2, %s177
        $region20: #{tpu_custom_call.1} parent=11 // pred_fallthru
          _
      $region12: #{tpu_custom_call.1} parent=5 // pred_fallthru
        _
      %p179 = scmp.lt.s32.totalorder %s16, 2
      // Predicated region
      $region21: #{tpu_custom_call.1} parent=5 // pred_check
        %p180 = pneg %p179
      $region22: #{tpu_custom_call.1} parent=5 // pred_check_branch
        %182 = sbr.rel (%p180) target = $region24
      $region23: #{tpu_custom_call.1} parent=5 // pred_region
        // Predicated region
        $region25: #{tpu_custom_call.1} parent=23 // pred_check
          %p183 = pneg %p55
        $region26: #{tpu_custom_call.1} parent=23 // pred_check_branch
          %185 = sbr.rel (%p183) target = $region28
        $region27: #{tpu_custom_call.1} parent=23 // pred_region
          %s186 = sand.u32 %s45, 1
          %s187 = scalar_lea.sflag [#allocation3], %s186
          %s188 = sand.u32 %s45, 1
          %s189 = smul.addr %s188, 144
          %s190 = scalar_lea.vmem [#allocation2], %s189
          %s192 = ssub.s32 2304, 2304
          %193 = vsyncadd %s187, %s192
          %s194 = smul.addr %s23, 36
          %s195 = smul.addr %s194, 64
          %s196 = scalar_lea.hbm %s0, %s195
          %s197 = sshll.u32 %s190, 4
          %s198 = int_to_ptr.vmem [resolvable:$true] %s197
          %203 = dma.hbm_to_vmem [thread:$0]  %s196, 2304, %s198, %s187, 64, 64, 4
        $region28: #{tpu_custom_call.1} parent=23 // pred_fallthru
          _
      $region24: #{tpu_custom_call.1} parent=5 // pred_fallthru
        _
      %p204 = scmp.le.s32.totalorder 1, %s16
      %p205 = scmp.lt.s32.totalorder %s16, 3
      %p206 = pnand %p204, %p205
      %p207 = pneg %p206
      // Predicated region
      $region29: #{tpu_custom_call.1} parent=5 // pred_check
        _
      $region30: #{tpu_custom_call.1} parent=5 // pred_check_branch
        %209 = sbr.rel (%p206) target = $region32
      $region31: #{tpu_custom_call.1} parent=5 // pred_region
        %s210 = ssub.s32 %s16, 1
        %s211 = sand.u32 %s48, 1
        %s212 = scalar_lea.sflag [#allocation3], %s211
        %s213 = sand.u32 %s48, 1
        %s214 = smul.addr %s213, 144
        %s215 = scalar_lea.vmem [#allocation2], %s214
        // Predicated region
        $region33: #{tpu_custom_call.1} parent=31 // pred_check
          %p216 = pneg %p61
        $region34: #{tpu_custom_call.1} parent=31 // pred_check_branch
          %218 = sbr.rel (%p216) target = $region36
        $region35: #{tpu_custom_call.1} parent=31 // pred_region
          %219 = dma.done %s212, 2304
        $region36: #{tpu_custom_call.1} parent=31 // pred_fallthru
          _
        // Predicated region
        $region37: #{tpu_custom_call.1} parent=31 // pred_check
          %p220 = pneg %p87
        $region38: #{tpu_custom_call.1} parent=31 // pred_check_branch
          %222 = sbr.rel (%p220) target = $region40
        $region39: #{tpu_custom_call.1} parent=31 // pred_region
          %223 = dma.done [#allocation6], 3072
        $region40: #{tpu_custom_call.1} parent=31 // pred_fallthru
          _
        %s224 = sand.u32 %s48, 1
        %s225 = scalar_lea.sflag [#allocation3], %s224
        %s226 = sand.u32 %s48, 1
        %s227 = smul.addr %s226, 144
        %s228 = scalar_lea.vmem [#allocation2], %s227
        %p229 = pneg %p61
        %p230 = pneg %p58
        %p231 = pneg %p87
        %p232 = pneg %p84
        %p233 = scmp.lt.s32.totalorder %s28, 0
        %s234 = scalar_select %p233, %s28, 0
        %s235 = scalar_lea.vmem %s2, %s234
        %p236 = pneg %p113
        %p237 = pneg %p110
        %p238 = pneg %p143
        %p239 = pneg %p140
        %s240 = sand.u32 %s130, 1
        %s241 = scalar_lea.sflag [#allocation4], %s240
        %s242 = sand.u32 %s130, 1
        %s243 = smul.addr %s242, 128
        %s244 = scalar_lea.vmem [#allocation7], %s243
        %p245 = scmp.lt.s32.totalorder %s28, 0
        %s246 = scalar_select %p245, %s28, 0
        %s247 = scalar_lea.vmem %s2, %s246
        %s248 = smul.u32 32, %s27
        %s250 = smul.u32 %s27, 16
        %s251 = smul.u32 %s27, 256
        %s252 = sshra.s32 %s251, 3
        %s253 = sand.u32 %s251, 7
        %s254 = smul.addr %s252, 4
        %s255 = scalar_lea.vmem %s215, %s254 [#allocation2]
        %v256 = vld [vmem:[%s255] sm:$0xf]
        %v257 = vld [vmem:[%s255 + $0x4] sm:$0xf]
        %v258 = vld [vmem:[%s255 + $0x8] sm:$0xf]
        %v259 = vld [vmem:[%s255 + $0xc] sm:$0xf]
        %v260 = vld [vmem:[%s255 + $0x10] sm:$0xf]
        %v261 = vld [vmem:[%s255 + $0x14] sm:$0xf]
        %v262 = vld [vmem:[%s255 + $0x18] sm:$0xf]
        %v263 = vld [vmem:[%s255 + $0x1c] sm:$0xf]
        %v264 = vld [vmem:[%s255 + $0x20] sm:$0xf]
        %v265 = vld [vmem:[%s255 + $0x24] sm:$0xf]
        %v266 = vld [vmem:[%s255 + $0x28] sm:$0xf]
        %v267 = vld [vmem:[%s255 + $0x2c] sm:$0xf]
        %v268 = vld [vmem:[%s255 + $0x30] sm:$0xf]
        %v269 = vld [vmem:[%s255 + $0x34] sm:$0xf]
        %v270 = vld [vmem:[%s255 + $0x38] sm:$0xf]
        %v271 = vld [vmem:[%s255 + $0x3c] sm:$0xf]
        %v272 = vld [vmem:[%s255 + $0x40] sm:$0xf]
        %v273 = vld [vmem:[%s255 + $0x44] sm:$0xf]
        %v274 = vld [vmem:[%s255 + $0x48] sm:$0xf]
        %v275 = vld [vmem:[%s255 + $0x4c] sm:$0xf]
        %v276 = vld [vmem:[%s255 + $0x50] sm:$0xf]
        %v277 = vld [vmem:[%s255 + $0x54] sm:$0xf]
        %v278 = vld [vmem:[%s255 + $0x58] sm:$0xf]
        %v279 = vld [vmem:[%s255 + $0x5c] sm:$0xf]
        %v280 = vld [vmem:[%s255 + $0x60] sm:$0xf]
        %v281 = vld [vmem:[%s255 + $0x64] sm:$0xf]
        %v282 = vld [vmem:[%s255 + $0x68] sm:$0xf]
        %v283 = vld [vmem:[%s255 + $0x6c] sm:$0xf]
        %v284 = vld [vmem:[%s255 + $0x70] sm:$0xf]
        %v285 = vld [vmem:[%s255 + $0x74] sm:$0xf]
        %v286 = vld [vmem:[%s255 + $0x78] sm:$0xf]
        %v287 = vld [vmem:[%s255 + $0x7c] sm:$0xf]
        %v288 = vld [vmem:[#allocation5] sm:$0xf]
        %v289 = vld [vmem:[#allocation5 + $0x4] sm:$0xf]
        %v290 = vld [vmem:[#allocation5 + $0x8] sm:$0xf]
        %v291 = vld [vmem:[#allocation5 + $0xc] sm:$0xf]
        %v292 = vld [vmem:[#allocation5 + $0x10] sm:$0xf]
        %v293 = vld [vmem:[#allocation5 + $0x14] sm:$0xf]
        %v294 = vld [vmem:[#allocation5 + $0x18] sm:$0xf]
        %v295 = vld [vmem:[#allocation5 + $0x1c] sm:$0xf]
        %v296 = vld [vmem:[#allocation5 + $0x20] sm:$0xf]
        %v297 = vld [vmem:[#allocation5 + $0x24] sm:$0xf]
        %v298 = vld [vmem:[#allocation5 + $0x28] sm:$0xf]
        %v299 = vld [vmem:[#allocation5 + $0x2c] sm:$0xf]
        %v300 = vld [vmem:[#allocation5 + $0x30] sm:$0xf]
        %v301 = vld [vmem:[#allocation5 + $0x34] sm:$0xf]
        %v302 = vld [vmem:[#allocation5 + $0x38] sm:$0xf]
        %v303 = vld [vmem:[#allocation5 + $0x3c] sm:$0xf]
        %s304 = sadd.s32 %s250, 1
        %s305 = smul.u32 %s304, 16
        %s306 = sshra.s32 %s305, 3
        %s307 = sand.u32 %s305, 7
        %s308 = smul.addr %s306, 4
        %s309 = scalar_lea.vmem %s215, %s308 [#allocation2]
        %v310 = vld [vmem:[%s309] sm:$0xf]
        %v311 = vld [vmem:[%s309 + $0x4] sm:$0xf]
        %v312 = vld [vmem:[%s309 + $0x8] sm:$0xf]
        %v313 = vld [vmem:[%s309 + $0xc] sm:$0xf]
        %v314 = vld [vmem:[%s309 + $0x10] sm:$0xf]
        %v315 = vld [vmem:[%s309 + $0x14] sm:$0xf]
        %v316 = vld [vmem:[%s309 + $0x18] sm:$0xf]
        %v317 = vld [vmem:[%s309 + $0x1c] sm:$0xf]
        %v318 = vld [vmem:[%s309 + $0x20] sm:$0xf]
        %v319 = vld [vmem:[%s309 + $0x24] sm:$0xf]
        %v320 = vld [vmem:[%s309 + $0x28] sm:$0xf]
        %v321 = vld [vmem:[%s309 + $0x2c] sm:$0xf]
        %v322 = vld [vmem:[%s309 + $0x30] sm:$0xf]
        %v323 = vld [vmem:[%s309 + $0x34] sm:$0xf]
        %v324 = vld [vmem:[%s309 + $0x38] sm:$0xf]
        %v325 = vld [vmem:[%s309 + $0x3c] sm:$0xf]
        %v326 = vld [vmem:[%s309 + $0x40] sm:$0xf]
        %v327 = vld [vmem:[%s309 + $0x44] sm:$0xf]
        %v328 = vld [vmem:[%s309 + $0x48] sm:$0xf]
        %v329 = vld [vmem:[%s309 + $0x4c] sm:$0xf]
        %v330 = vld [vmem:[%s309 + $0x50] sm:$0xf]
        %v331 = vld [vmem:[%s309 + $0x54] sm:$0xf]
        %v332 = vld [vmem:[%s309 + $0x58] sm:$0xf]
        %v333 = vld [vmem:[%s309 + $0x5c] sm:$0xf]
        %v334 = vld [vmem:[%s309 + $0x60] sm:$0xf]
        %v335 = vld [vmem:[%s309 + $0x64] sm:$0xf]
        %v336 = vld [vmem:[%s309 + $0x68] sm:$0xf]
        %v337 = vld [vmem:[%s309 + $0x6c] sm:$0xf]
        %v338 = vld [vmem:[%s309 + $0x70] sm:$0xf]
        %v339 = vld [vmem:[%s309 + $0x74] sm:$0xf]
        %v340 = vld [vmem:[%s309 + $0x78] sm:$0xf]
        %v341 = vld [vmem:[%s309 + $0x7c] sm:$0xf]
        %s342 = scalar_lea.vmem [#allocation5], 64
        %v343 = vld [vmem:[%s342] sm:$0xf]
        %v344 = vld [vmem:[%s342 + $0x4] sm:$0xf]
        %v345 = vld [vmem:[%s342 + $0x8] sm:$0xf]
        %v346 = vld [vmem:[%s342 + $0xc] sm:$0xf]
        %v347 = vld [vmem:[%s342 + $0x10] sm:$0xf]
        %v348 = vld [vmem:[%s342 + $0x14] sm:$0xf]
        %v349 = vld [vmem:[%s342 + $0x18] sm:$0xf]
        %v350 = vld [vmem:[%s342 + $0x1c] sm:$0xf]
        %v351 = vld [vmem:[%s342 + $0x20] sm:$0xf]
        %v352 = vld [vmem:[%s342 + $0x24] sm:$0xf]
        %v353 = vld [vmem:[%s342 + $0x28] sm:$0xf]
        %v354 = vld [vmem:[%s342 + $0x2c] sm:$0xf]
        %v355 = vld [vmem:[%s342 + $0x30] sm:$0xf]
        %v356 = vld [vmem:[%s342 + $0x34] sm:$0xf]
        %v357 = vld [vmem:[%s342 + $0x38] sm:$0xf]
        %v358 = vld [vmem:[%s342 + $0x3c] sm:$0xf]
        %v391 = vunpack.c.l.b16 %v310
        %v392 = vunpack.c.l.b16 %v311
        %v393 = vunpack.c.l.b16 %v312
        %v394 = vunpack.c.l.b16 %v313
        %v395 = vunpack.c.l.b16 %v314
        %v396 = vunpack.c.l.b16 %v315
        %v397 = vunpack.c.l.b16 %v316
        %v398 = vunpack.c.l.b16 %v317
        %v399 = vunpack.c.l.b16 %v318
        %v400 = vunpack.c.l.b16 %v319
        %v401 = vunpack.c.l.b16 %v320
        %v402 = vunpack.c.l.b16 %v321
        %v403 = vunpack.c.l.b16 %v322
        %v404 = vunpack.c.l.b16 %v323
        %v405 = vunpack.c.l.b16 %v324
        %v406 = vunpack.c.l.b16 %v325
        %v407 = vunpack.c.l.b16 %v326
        %v408 = vunpack.c.l.b16 %v327
        %v409 = vunpack.c.l.b16 %v328
        %v410 = vunpack.c.l.b16 %v329
        %v411 = vunpack.c.l.b16 %v330
        %v412 = vunpack.c.l.b16 %v331
        %v413 = vunpack.c.l.b16 %v332
        %v414 = vunpack.c.l.b16 %v333
        %v415 = vunpack.c.l.b16 %v334
        %v416 = vunpack.c.l.b16 %v335
        %v417 = vunpack.c.l.b16 %v336
        %v418 = vunpack.c.l.b16 %v337
        %v419 = vunpack.c.l.b16 %v338
        %v420 = vunpack.c.l.b16 %v339
        %v421 = vunpack.c.l.b16 %v340
        %v422 = vunpack.c.l.b16 %v341
        %v423 = vpack.c.b16 %v392, %v391
        %v424 = vpack.c.b16 %v394, %v393
        %v425 = vpack.c.b16 %v396, %v395
        %v426 = vpack.c.b16 %v398, %v397
        %v427 = vpack.c.b16 %v400, %v399
        %v428 = vpack.c.b16 %v402, %v401
        %v429 = vpack.c.b16 %v404, %v403
        %v430 = vpack.c.b16 %v406, %v405
        %v431 = vpack.c.b16 %v408, %v407
        %v432 = vpack.c.b16 %v410, %v409
        %v433 = vpack.c.b16 %v412, %v411
        %v434 = vpack.c.b16 %v414, %v413
        %v435 = vpack.c.b16 %v416, %v415
        %v436 = vpack.c.b16 %v418, %v417
        %v437 = vpack.c.b16 %v420, %v419
        %v438 = vpack.c.b16 %v422, %v421
        %v471 = vunpack.c.l.b16 %v343
        %v472 = vunpack.c.l.b16 %v344
        %v473 = vunpack.c.l.b16 %v345
        %v474 = vunpack.c.l.b16 %v346
        %v475 = vunpack.c.l.b16 %v347
        %v476 = vunpack.c.l.b16 %v348
        %v477 = vunpack.c.l.b16 %v349
        %v478 = vunpack.c.l.b16 %v350
        %v479 = vunpack.c.l.b16 %v351
        %v480 = vunpack.c.l.b16 %v352
        %v481 = vunpack.c.l.b16 %v353
        %v482 = vunpack.c.l.b16 %v354
        %v483 = vunpack.c.l.b16 %v355
        %v484 = vunpack.c.l.b16 %v356
        %v485 = vunpack.c.l.b16 %v357
        %v486 = vunpack.c.l.b16 %v358
        %v487 = vpack.c.b16 %v472, %v471
        %v488 = vpack.c.b16 %v474, %v473
        %v489 = vpack.c.b16 %v476, %v475
        %v490 = vpack.c.b16 %v478, %v477
        %v491 = vpack.c.b16 %v480, %v479
        %v492 = vpack.c.b16 %v482, %v481
        %v493 = vpack.c.b16 %v484, %v483
        %v494 = vpack.c.b16 %v486, %v485
        %503 = vmatprep.subr.bf16.mxu0 0
        %504 = vmatpush1.bf16.msra.mxu0 %v487
        %505 = vmatprep.subr.bf16.mxu0 0
        %506 = vmatpush1.bf16.msra.mxu0 %v488
        %507 = vmatprep.subr.bf16.mxu0 0
        %508 = vmatpush1.bf16.msra.mxu0 %v489
        %509 = vmatprep.subr.bf16.mxu0 0
        %510 = vmatpush1.bf16.msra.mxu0 %v490
        %511 = vmatprep.subr.bf16.mxu0 0
        %512 = vmatpush1.bf16.msra.mxu0 %v491
        %513 = vmatprep.subr.bf16.mxu0 0
        %514 = vmatpush1.bf16.msra.mxu0 %v492
        %515 = vmatprep.subr.bf16.mxu0 0
        %516 = vmatpush1.bf16.msra.mxu0 %v493
        %517 = vmatprep.subr.bf16.mxu0 0
        %518 = vmatpush1.bf16.msra.mxu0 %v494
        %519 = vmatprep.subr.bf16.mxu0 0
        %520 = vmatpush1.bf16.msra.mxu0 0
        %521 = vmatprep.subr.bf16.mxu0 0
        %522 = vmatpush1.bf16.msra.mxu0 0
        %523 = vmatprep.subr.bf16.mxu0 0
        %524 = vmatpush1.bf16.msra.mxu0 0
        %525 = vmatprep.subr.bf16.mxu0 0
        %526 = vmatpush1.bf16.msra.mxu0 0
        %527 = vmatprep.subr.bf16.mxu0 0
        %528 = vmatpush1.bf16.msra.mxu0 0
        %529 = vmatprep.subr.bf16.mxu0 0
        %530 = vmatpush1.bf16.msra.mxu0 0
        %531 = vmatprep.subr.bf16.mxu0 0
        %532 = vmatpush1.bf16.msra.mxu0 0
        %533 = vmatprep.subr.bf16.mxu0 0
        %534 = vmatpush1.bf16.msra.mxu0 0
        %535 = vmatprep.mubr.bf16.mxu0 0
        %536 = vmatmul.mubr.bf16.gmra.mrb[0].mxu0 %v423
        %v537 = vpop.f32.mrb[0].mxu0
        %v538 = vadd.f32 0.0, %v537
        %v539 = vpop.f32.mrb[0].mxu0
        %v540 = vpop.f32.mrb[0].mxu0
        %v541 = vadd.f32 0.0, %v540
        %v542 = vpop.f32.mrb[0].mxu0
        %543 = vmatprep.mubr.bf16.mxu0 0
        %544 = vmatmul.mubr.bf16.gmra.mrb[0].mxu0 %v424
        %v545 = vpop.f32.mrb[0].mxu0
        %v546 = vadd.f32 0.0, %v545
        %v547 = vpop.f32.mrb[0].mxu0
        %v548 = vpop.f32.mrb[0].mxu0
        %v549 = vadd.f32 0.0, %v548
        %v550 = vpop.f32.mrb[0].mxu0
        %551 = vmatprep.mubr.bf16.mxu0 0
        %552 = vmatmul.mubr.bf16.gmra.mrb[0].mxu0 %v425
        %v553 = vpop.f32.mrb[0].mxu0
        %v554 = vadd.f32 0.0, %v553
        %v555 = vpop.f32.mrb[0].mxu0
        %v556 = vpop.f32.mrb[0].mxu0
        %v557 = vadd.f32 0.0, %v556
        %v558 = vpop.f32.mrb[0].mxu0
        %559 = vmatprep.mubr.bf16.mxu0 0
        %560 = vmatmul.mubr.bf16.gmra.mrb[0].mxu0 %v426
        %v561 = vpop.f32.mrb[0].mxu0
        %v562 = vadd.f32 0.0, %v561
        %v563 = vpop.f32.mrb[0].mxu0
        %v564 = vpop.f32.mrb[0].mxu0
        %v565 = vadd.f32 0.0, %v564
        %v566 = vpop.f32.mrb[0].mxu0
        %567 = vmatprep.mubr.bf16.mxu0 0
        %568 = vmatmul.mubr.bf16.gmra.mrb[0].mxu0 %v427
        %v569 = vpop.f32.mrb[0].mxu0
        %v570 = vadd.f32 0.0, %v569
        %v571 = vpop.f32.mrb[0].mxu0
        %v572 = vpop.f32.mrb[0].mxu0
        %v573 = vadd.f32 0.0, %v572
        %v574 = vpop.f32.mrb[0].mxu0
        %575 = vmatprep.mubr.bf16.mxu0 0
        %576 = vmatmul.mubr.bf16.gmra.mrb[0].mxu0 %v428
        %v577 = vpop.f32.mrb[0].mxu0
        %v578 = vadd.f32 0.0, %v577
        %v579 = vpop.f32.mrb[0].mxu0
        %v580 = vpop.f32.mrb[0].mxu0
        %v581 = vadd.f32 0.0, %v580
        %v582 = vpop.f32.mrb[0].mxu0
        %583 = vmatprep.mubr.bf16.mxu0 0
        %584 = vmatmul.mubr.bf16.gmra.mrb[0].mxu0 %v429
        %v585 = vpop.f32.mrb[0].mxu0
        %v586 = vadd.f32 0.0, %v585
        %v587 = vpop.f32.mrb[0].mxu0
        %v588 = vpop.f32.mrb[0].mxu0
        %v589 = vadd.f32 0.0, %v588
        %v590 = vpop.f32.mrb[0].mxu0
        %591 = vmatprep.mubr.bf16.mxu0 0
        %592 = vmatmul.mubr.bf16.gmra.mrb[0].mxu0 %v430
        %v593 = vpop.f32.mrb[0].mxu0
        %v594 = vadd.f32 0.0, %v593
        %v595 = vpop.f32.mrb[0].mxu0
        %v596 = vpop.f32.mrb[0].mxu0
        %v597 = vadd.f32 0.0, %v596
        %v598 = vpop.f32.mrb[0].mxu0
        %599 = vmatprep.mubr.bf16.mxu0 0
        %600 = vmatmul.mubr.bf16.gmra.mrb[0].mxu0 %v431
        %v601 = vpop.f32.mrb[0].mxu0
        %v602 = vadd.f32 0.0, %v601
        %v603 = vpop.f32.mrb[0].mxu0
        %v604 = vpop.f32.mrb[0].mxu0
        %v605 = vadd.f32 0.0, %v604
        %v606 = vpop.f32.mrb[0].mxu0
        %607 = vmatprep.mubr.bf16.mxu0 0
        %608 = vmatmul.mubr.bf16.gmra.mrb[0].mxu0 %v432
        %v609 = vpop.f32.mrb[0].mxu0
        %v610 = vadd.f32 0.0, %v609
        %v611 = vpop.f32.mrb[0].mxu0
        %v612 = vpop.f32.mrb[0].mxu0
        %v613 = vadd.f32 0.0, %v612
        %v614 = vpop.f32.mrb[0].mxu0
        %615 = vmatprep.mubr.bf16.mxu0 0
        %616 = vmatmul.mubr.bf16.gmra.mrb[0].mxu0 %v433
        %v617 = vpop.f32.mrb[0].mxu0
        %v618 = vadd.f32 0.0, %v617
        %v619 = vpop.f32.mrb[0].mxu0
        %v620 = vpop.f32.mrb[0].mxu0
        %v621 = vadd.f32 0.0, %v620
        %v622 = vpop.f32.mrb[0].mxu0
        %623 = vmatprep.mubr.bf16.mxu0 0
        %624 = vmatmul.mubr.bf16.gmra.mrb[0].mxu0 %v434
        %v625 = vpop.f32.mrb[0].mxu0
        %v626 = vadd.f32 0.0, %v625
        %v627 = vpop.f32.mrb[0].mxu0
        %v628 = vpop.f32.mrb[0].mxu0
        %v629 = vadd.f32 0.0, %v628
        %v630 = vpop.f32.mrb[0].mxu0
        %631 = vmatprep.mubr.bf16.mxu0 0
        %632 = vmatmul.mubr.bf16.gmra.mrb[0].mxu0 %v435
        %v633 = vpop.f32.mrb[0].mxu0
        %v634 = vadd.f32 0.0, %v633
        %v635 = vpop.f32.mrb[0].mxu0
        %v636 = vpop.f32.mrb[0].mxu0
        %v637 = vadd.f32 0.0, %v636
        %v638 = vpop.f32.mrb[0].mxu0
        %639 = vmatprep.mubr.bf16.mxu0 0
        %640 = vmatmul.mubr.bf16.gmra.mrb[0].mxu0 %v436
        %v641 = vpop.f32.mrb[0].mxu0
        %v642 = vadd.f32 0.0, %v641
        %v643 = vpop.f32.mrb[0].mxu0
        %v644 = vpop.f32.mrb[0].mxu0
        %v645 = vadd.f32 0.0, %v644
        %v646 = vpop.f32.mrb[0].mxu0
        %647 = vmatprep.mubr.bf16.mxu0 0
        %648 = vmatmul.mubr.bf16.gmra.mrb[0].mxu0 %v437
        %v649 = vpop.f32.mrb[0].mxu0
        %v650 = vadd.f32 0.0, %v649
        %v651 = vpop.f32.mrb[0].mxu0
        %v652 = vpop.f32.mrb[0].mxu0
        %v653 = vadd.f32 0.0, %v652
        %v654 = vpop.f32.mrb[0].mxu0
        %655 = vmatprep.mubr.bf16.mxu0 0
        %656 = vmatmul.mubr.bf16.gmra.mrb[0].mxu0 %v438
        %v657 = vpop.f32.mrb[0].mxu0
        %v658 = vadd.f32 0.0, %v657
        %v659 = vpop.f32.mrb[0].mxu0
        %v660 = vpop.f32.mrb[0].mxu0
        %v661 = vadd.f32 0.0, %v660
        %v662 = vpop.f32.mrb[0].mxu0
        %663 = vdwg.mxu0
        %v696 = vunpack.c.l.b16 %v256
        %v697 = vunpack.c.l.b16 %v257
        %v698 = vunpack.c.l.b16 %v258
        %v699 = vunpack.c.l.b16 %v259
        %v700 = vunpack.c.l.b16 %v260
        %v701 = vunpack.c.l.b16 %v261
        %v702 = vunpack.c.l.b16 %v262
        %v703 = vunpack.c.l.b16 %v263
        %v704 = vunpack.c.l.b16 %v264
        %v705 = vunpack.c.l.b16 %v265
        %v706 = vunpack.c.l.b16 %v266
        %v707 = vunpack.c.l.b16 %v267
        %v708 = vunpack.c.l.b16 %v268
        %v709 = vunpack.c.l.b16 %v269
        %v710 = vunpack.c.l.b16 %v270
        %v711 = vunpack.c.l.b16 %v271
        %v712 = vunpack.c.l.b16 %v272
        %v713 = vunpack.c.l.b16 %v273
        %v714 = vunpack.c.l.b16 %v274
        %v715 = vunpack.c.l.b16 %v275
        %v716 = vunpack.c.l.b16 %v276
        %v717 = vunpack.c.l.b16 %v277
        %v718 = vunpack.c.l.b16 %v278
        %v719 = vunpack.c.l.b16 %v279
        %v720 = vunpack.c.l.b16 %v280
        %v721 = vunpack.c.l.b16 %v281
        %v722 = vunpack.c.l.b16 %v282
        %v723 = vunpack.c.l.b16 %v283
        %v724 = vunpack.c.l.b16 %v284
        %v725 = vunpack.c.l.b16 %v285
        %v726 = vunpack.c.l.b16 %v286
        %v727 = vunpack.c.l.b16 %v287
        %v728 = vpack.c.b16 %v697, %v696
        %v729 = vpack.c.b16 %v699, %v698
        %v730 = vpack.c.b16 %v701, %v700
        %v731 = vpack.c.b16 %v703, %v702
        %v732 = vpack.c.b16 %v705, %v704
        %v733 = vpack.c.b16 %v707, %v706
        %v734 = vpack.c.b16 %v709, %v708
        %v735 = vpack.c.b16 %v711, %v710
        %v736 = vpack.c.b16 %v713, %v712
        %v737 = vpack.c.b16 %v715, %v714
        %v738 = vpack.c.b16 %v717, %v716
        %v739 = vpack.c.b16 %v719, %v718
        %v740 = vpack.c.b16 %v721, %v720
        %v741 = vpack.c.b16 %v723, %v722
        %v742 = vpack.c.b16 %v725, %v724
        %v743 = vpack.c.b16 %v727, %v726
        %v776 = vunpack.c.l.b16 %v288
        %v777 = vunpack.c.l.b16 %v289
        %v778 = vunpack.c.l.b16 %v290
        %v779 = vunpack.c.l.b16 %v291
        %v780 = vunpack.c.l.b16 %v292
        %v781 = vunpack.c.l.b16 %v293
        %v782 = vunpack.c.l.b16 %v294
        %v783 = vunpack.c.l.b16 %v295
        %v784 = vunpack.c.l.b16 %v296
        %v785 = vunpack.c.l.b16 %v297
        %v786 = vunpack.c.l.b16 %v298
        %v787 = vunpack.c.l.b16 %v299
        %v788 = vunpack.c.l.b16 %v300
        %v789 = vunpack.c.l.b16 %v301
        %v790 = vunpack.c.l.b16 %v302
        %v791 = vunpack.c.l.b16 %v303
        %v792 = vpack.c.b16 %v777, %v776
        %v793 = vpack.c.b16 %v779, %v778
        %v794 = vpack.c.b16 %v781, %v780
        %v795 = vpack.c.b16 %v783, %v782
        %v796 = vpack.c.b16 %v785, %v784
        %v797 = vpack.c.b16 %v787, %v786
        %v798 = vpack.c.b16 %v789, %v788
        %v799 = vpack.c.b16 %v791, %v790
        %808 = vmatprep.subr.bf16.mxu0 0
        %809 = vmatpush1.bf16.msra.mxu0 %v792
        %810 = vmatprep.subr.bf16.mxu0 0
        %811 = vmatpush1.bf16.msra.mxu0 %v793
        %812 = vmatprep.subr.bf16.mxu0 0
        %813 = vmatpush1.bf16.msra.mxu0 %v794
        %814 = vmatprep.subr.bf16.mxu0 0
        %815 = vmatpush1.bf16.msra.mxu0 %v795
        %816 = vmatprep.subr.bf16.mxu0 0
        %817 = vmatpush1.bf16.msra.mxu0 %v796
        %818 = vmatprep.subr.bf16.mxu0 0
        %819 = vmatpush1.bf16.msra.mxu0 %v797
        %820 = vmatprep.subr.bf16.mxu0 0
        %821 = vmatpush1.bf16.msra.mxu0 %v798
        %822 = vmatprep.subr.bf16.mxu0 0
        %823 = vmatpush1.bf16.msra.mxu0 %v799
        %824 = vmatprep.subr.bf16.mxu0 0
        %825 = vmatpush1.bf16.msra.mxu0 0
        %826 = vmatprep.subr.bf16.mxu0 0
        %827 = vmatpush1.bf16.msra.mxu0 0
        %828 = vmatprep.subr.bf16.mxu0 0
        %829 = vmatpush1.bf16.msra.mxu0 0
        %830 = vmatprep.subr.bf16.mxu0 0
        %831 = vmatpush1.bf16.msra.mxu0 0
        %832 = vmatprep.subr.bf16.mxu0 0
        %833 = vmatpush1.bf16.msra.mxu0 0
        %834 = vmatprep.subr.bf16.mxu0 0
        %835 = vmatpush1.bf16.msra.mxu0 0
        %836 = vmatprep.subr.bf16.mxu0 0
        %837 = vmatpush1.bf16.msra.mxu0 0
        %838 = vmatprep.subr.bf16.mxu0 0
        %839 = vmatpush1.bf16.msra.mxu0 0
        %840 = vmatprep.mubr.bf16.mxu0 0
        %841 = vmatmul.mubr.bf16.gmra.mrb[0].mxu0 %v728
        %v842 = vpop.f32.mrb[0].mxu0
        %v843 = vadd.f32 %v538, %v842
        %v844 = vpop.f32.mrb[0].mxu0
        %v845 = vpop.f32.mrb[0].mxu0
        %v846 = vadd.f32 %v541, %v845
        %v847 = vpop.f32.mrb[0].mxu0
        %848 = vmatprep.mubr.bf16.mxu0 0
        %849 = vmatmul.mubr.bf16.gmra.mrb[0].mxu0 %v729
        %v850 = vpop.f32.mrb[0].mxu0
        %v851 = vadd.f32 %v546, %v850
        %v852 = vpop.f32.mrb[0].mxu0
        %v853 = vpop.f32.mrb[0].mxu0
        %v854 = vadd.f32 %v549, %v853
        %v855 = vpop.f32.mrb[0].mxu0
        %856 = vmatprep.mubr.bf16.mxu0 0
        %857 = vmatmul.mubr.bf16.gmra.mrb[0].mxu0 %v730
        %v858 = vpop.f32.mrb[0].mxu0
        %v859 = vadd.f32 %v554, %v858
        %v860 = vpop.f32.mrb[0].mxu0
        %v861 = vpop.f32.mrb[0].mxu0
        %v862 = vadd.f32 %v557, %v861
        %v863 = vpop.f32.mrb[0].mxu0
        %864 = vmatprep.mubr.bf16.mxu0 0
        %865 = vmatmul.mubr.bf16.gmra.mrb[0].mxu0 %v731
        %v866 = vpop.f32.mrb[0].mxu0
        %v867 = vadd.f32 %v562, %v866
        %v868 = vpop.f32.mrb[0].mxu0
        %v869 = vpop.f32.mrb[0].mxu0
        %v870 = vadd.f32 %v565, %v869
        %v871 = vpop.f32.mrb[0].mxu0
        %872 = vmatprep.mubr.bf16.mxu0 0
        %873 = vmatmul.mubr.bf16.gmra.mrb[0].mxu0 %v732
        %v874 = vpop.f32.mrb[0].mxu0
        %v875 = vadd.f32 %v570, %v874
        %v876 = vpop.f32.mrb[0].mxu0
        %v877 = vpop.f32.mrb[0].mxu0
        %v878 = vadd.f32 %v573, %v877
        %v879 = vpop.f32.mrb[0].mxu0
        %880 = vmatprep.mubr.bf16.mxu0 0
        %881 = vmatmul.mubr.bf16.gmra.mrb[0].mxu0 %v733
        %v882 = vpop.f32.mrb[0].mxu0
        %v883 = vadd.f32 %v578, %v882
        %v884 = vpop.f32.mrb[0].mxu0
        %v885 = vpop.f32.mrb[0].mxu0
        %v886 = vadd.f32 %v581, %v885
        %v887 = vpop.f32.mrb[0].mxu0
        %888 = vmatprep.mubr.bf16.mxu0 0
        %889 = vmatmul.mubr.bf16.gmra.mrb[0].mxu0 %v734
        %v890 = vpop.f32.mrb[0].mxu0
        %v891 = vadd.f32 %v586, %v890
        %v892 = vpop.f32.mrb[0].mxu0
        %v893 = vpop.f32.mrb[0].mxu0
        %v894 = vadd.f32 %v589, %v893
        %v895 = vpop.f32.mrb[0].mxu0
        %896 = vmatprep.mubr.bf16.mxu0 0
        %897 = vmatmul.mubr.bf16.gmra.mrb[0].mxu0 %v735
        %v898 = vpop.f32.mrb[0].mxu0
        %v899 = vadd.f32 %v594, %v898
        %v900 = vpop.f32.mrb[0].mxu0
        %v901 = vpop.f32.mrb[0].mxu0
        %v902 = vadd.f32 %v597, %v901
        %v903 = vpop.f32.mrb[0].mxu0
        %904 = vmatprep.mubr.bf16.mxu0 0
        %905 = vmatmul.mubr.bf16.gmra.mrb[0].mxu0 %v736
        %v906 = vpop.f32.mrb[0].mxu0
        %v907 = vadd.f32 %v602, %v906
        %v908 = vpop.f32.mrb[0].mxu0
        %v909 = vpop.f32.mrb[0].mxu0
        %v910 = vadd.f32 %v605, %v909
        %v911 = vpop.f32.mrb[0].mxu0
        %912 = vmatprep.mubr.bf16.mxu0 0
        %913 = vmatmul.mubr.bf16.gmra.mrb[0].mxu0 %v737
        %v914 = vpop.f32.mrb[0].mxu0
        %v915 = vadd.f32 %v610, %v914
        %v916 = vpop.f32.mrb[0].mxu0
        %v917 = vpop.f32.mrb[0].mxu0
        %v918 = vadd.f32 %v613, %v917
        %v919 = vpop.f32.mrb[0].mxu0
        %920 = vmatprep.mubr.bf16.mxu0 0
        %921 = vmatmul.mubr.bf16.gmra.mrb[0].mxu0 %v738
        %v922 = vpop.f32.mrb[0].mxu0
        %v923 = vadd.f32 %v618, %v922
        %v924 = vpop.f32.mrb[0].mxu0
        %v925 = vpop.f32.mrb[0].mxu0
        %v926 = vadd.f32 %v621, %v925
        %v927 = vpop.f32.mrb[0].mxu0
        %928 = vmatprep.mubr.bf16.mxu0 0
        %929 = vmatmul.mubr.bf16.gmra.mrb[0].mxu0 %v739
        %v930 = vpop.f32.mrb[0].mxu0
        %v931 = vadd.f32 %v626, %v930
        %v932 = vpop.f32.mrb[0].mxu0
        %v933 = vpop.f32.mrb[0].mxu0
        %v934 = vadd.f32 %v629, %v933
        %v935 = vpop.f32.mrb[0].mxu0
        %936 = vmatprep.mubr.bf16.mxu0 0
        %937 = vmatmul.mubr.bf16.gmra.mrb[0].mxu0 %v740
        %v938 = vpop.f32.mrb[0].mxu0
        %v939 = vadd.f32 %v634, %v938
        %v940 = vpop.f32.mrb[0].mxu0
        %v941 = vpop.f32.mrb[0].mxu0
        %v942 = vadd.f32 %v637, %v941
        %v943 = vpop.f32.mrb[0].mxu0
        %944 = vmatprep.mubr.bf16.mxu0 0
        %945 = vmatmul.mubr.bf16.gmra.mrb[0].mxu0 %v741
        %v946 = vpop.f32.mrb[0].mxu0
        %v947 = vadd.f32 %v642, %v946
        %v948 = vpop.f32.mrb[0].mxu0
        %v949 = vpop.f32.mrb[0].mxu0
        %v950 = vadd.f32 %v645, %v949
        %v951 = vpop.f32.mrb[0].mxu0
        %952 = vmatprep.mubr.bf16.mxu0 0
        %953 = vmatmul.mubr.bf16.gmra.mrb[0].mxu0 %v742
        %v954 = vpop.f32.mrb[0].mxu0
        %v955 = vadd.f32 %v650, %v954
        %v956 = vpop.f32.mrb[0].mxu0
        %v957 = vpop.f32.mrb[0].mxu0
        %v958 = vadd.f32 %v653, %v957
        %v959 = vpop.f32.mrb[0].mxu0
        %960 = vmatprep.mubr.bf16.mxu0 0
        %961 = vmatmul.mubr.bf16.gmra.mrb[0].mxu0 %v743
        %v962 = vpop.f32.mrb[0].mxu0
        %v963 = vadd.f32 %v658, %v962
        %v964 = vpop.f32.mrb[0].mxu0
        %v965 = vpop.f32.mrb[0].mxu0
        %v966 = vadd.f32 %v661, %v965
        %v967 = vpop.f32.mrb[0].mxu0
        %968 = vdwg.mxu0
        %s969 = sadd.s32 %s250, 2
        %s970 = smul.u32 %s969, 16
        %s971 = sshra.s32 %s970, 3
        %s972 = sand.u32 %s970, 7
        %s973 = smul.addr %s971, 4
        %s974 = scalar_lea.vmem %s215, %s973 [#allocation2]
        %v975 = vld [vmem:[%s974] sm:$0xf]
        %v976 = vld [vmem:[%s974 + $0x4] sm:$0xf]
        %v977 = vld [vmem:[%s974 + $0x8] sm:$0xf]
        %v978 = vld [vmem:[%s974 + $0xc] sm:$0xf]
        %v979 = vld [vmem:[%s974 + $0x10] sm:$0xf]
        %v980 = vld [vmem:[%s974 + $0x14] sm:$0xf]
        %v981 = vld [vmem:[%s974 + $0x18] sm:$0xf]
        %v982 = vld [vmem:[%s974 + $0x1c] sm:$0xf]
        %v983 = vld [vmem:[%s974 + $0x20] sm:$0xf]
        %v984 = vld [vmem:[%s974 + $0x24] sm:$0xf]
        %v985 = vld [vmem:[%s974 + $0x28] sm:$0xf]
        %v986 = vld [vmem:[%s974 + $0x2c] sm:$0xf]
        %v987 = vld [vmem:[%s974 + $0x30] sm:$0xf]
        %v988 = vld [vmem:[%s974 + $0x34] sm:$0xf]
        %v989 = vld [vmem:[%s974 + $0x38] sm:$0xf]
        %v990 = vld [vmem:[%s974 + $0x3c] sm:$0xf]
        %v991 = vld [vmem:[%s974 + $0x40] sm:$0xf]
        %v992 = vld [vmem:[%s974 + $0x44] sm:$0xf]
        %v993 = vld [vmem:[%s974 + $0x48] sm:$0xf]
        %v994 = vld [vmem:[%s974 + $0x4c] sm:$0xf]
        %v995 = vld [vmem:[%s974 + $0x50] sm:$0xf]
        %v996 = vld [vmem:[%s974 + $0x54] sm:$0xf]
        %v997 = vld [vmem:[%s974 + $0x58] sm:$0xf]
        %v998 = vld [vmem:[%s974 + $0x5c] sm:$0xf]
        %v999 = vld [vmem:[%s974 + $0x60] sm:$0xf]
        %v1000 = vld [vmem:[%s974 + $0x64] sm:$0xf]
        %v1001 = vld [vmem:[%s974 + $0x68] sm:$0xf]
        %v1002 = vld [vmem:[%s974 + $0x6c] sm:$0xf]
        %v1003 = vld [vmem:[%s974 + $0x70] sm:$0xf]
        %v1004 = vld [vmem:[%s974 + $0x74] sm:$0xf]
        %v1005 = vld [vmem:[%s974 + $0x78] sm:$0xf]
        %v1006 = vld [vmem:[%s974 + $0x7c] sm:$0xf]
        %s1007 = scalar_lea.vmem [#allocation5], 128
        %v1008 = vld [vmem:[%s1007] sm:$0xf]
        %v1009 = vld [vmem:[%s1007 + $0x4] sm:$0xf]
        %v1010 = vld [vmem:[%s1007 + $0x8] sm:$0xf]
        %v1011 = vld [vmem:[%s1007 + $0xc] sm:$0xf]
        %v1012 = vld [vmem:[%s1007 + $0x10] sm:$0xf]
        %v1013 = vld [vmem:[%s1007 + $0x14] sm:$0xf]
        %v1014 = vld [vmem:[%s1007 + $0x18] sm:$0xf]
        %v1015 = vld [vmem:[%s1007 + $0x1c] sm:$0xf]
        %v1016 = vld [vmem:[%s1007 + $0x20] sm:$0xf]
        %v1017 = vld [vmem:[%s1007 + $0x24] sm:$0xf]
        %v1018 = vld [vmem:[%s1007 + $0x28] sm:$0xf]
        %v1019 = vld [vmem:[%s1007 + $0x2c] sm:$0xf]
        %v1020 = vld [vmem:[%s1007 + $0x30] sm:$0xf]
        %v1021 = vld [vmem:[%s1007 + $0x34] sm:$0xf]
        %v1022 = vld [vmem:[%s1007 + $0x38] sm:$0xf]
        %v1023 = vld [vmem:[%s1007 + $0x3c] sm:$0xf]
        %v1056 = vunpack.c.l.b16 %v975
        %v1057 = vunpack.c.l.b16 %v976
        %v1058 = vunpack.c.l.b16 %v977
        %v1059 = vunpack.c.l.b16 %v978
        %v1060 = vunpack.c.l.b16 %v979
        %v1061 = vunpack.c.l.b16 %v980
        %v1062 = vunpack.c.l.b16 %v981
        %v1063 = vunpack.c.l.b16 %v982
        %v1064 = vunpack.c.l.b16 %v983
        %v1065 = vunpack.c.l.b16 %v984
        %v1066 = vunpack.c.l.b16 %v985
        %v1067 = vunpack.c.l.b16 %v986
        %v1068 = vunpack.c.l.b16 %v987
        %v1069 = vunpack.c.l.b16 %v988
        %v1070 = vunpack.c.l.b16 %v989
        %v1071 = vunpack.c.l.b16 %v990
        %v1072 = vunpack.c.l.b16 %v991
        %v1073 = vunpack.c.l.b16 %v992
        %v1074 = vunpack.c.l.b16 %v993
        %v1075 = vunpack.c.l.b16 %v994
        %v1076 = vunpack.c.l.b16 %v995
        %v1077 = vunpack.c.l.b16 %v996
        %v1078 = vunpack.c.l.b16 %v997
        %v1079 = vunpack.c.l.b16 %v998
        %v1080 = vunpack.c.l.b16 %v999
        %v1081 = vunpack.c.l.b16 %v1000
        %v1082 = vunpack.c.l.b16 %v1001
        %v1083 = vunpack.c.l.b16 %v1002
        %v1084 = vunpack.c.l.b16 %v1003
        %v1085 = vunpack.c.l.b16 %v1004
        %v1086 = vunpack.c.l.b16 %v1005
        %v1087 = vunpack.c.l.b16 %v1006
        %v1088 = vpack.c.b16 %v1057, %v1056
        %v1089 = vpack.c.b16 %v1059, %v1058
        %v1090 = vpack.c.b16 %v1061, %v1060
        %v1091 = vpack.c.b16 %v1063, %v1062
        %v1092 = vpack.c.b16 %v1065, %v1064
        %v1093 = vpack.c.b16 %v1067, %v1066
        %v1094 = vpack.c.b16 %v1069, %v1068
        %v1095 = vpack.c.b16 %v1071, %v1070
        %v1096 = vpack.c.b16 %v1073, %v1072
        %v1097 = vpack.c.b16 %v1075, %v1074
        %v1098 = vpack.c.b16 %v1077, %v1076
        %v1099 = vpack.c.b16 %v1079, %v1078
        %v1100 = vpack.c.b16 %v1081, %v1080
        %v1101 = vpack.c.b16 %v1083, %v1082
        %v1102 = vpack.c.b16 %v1085, %v1084
        %v1103 = vpack.c.b16 %v1087, %v1086
        %v1136 = vunpack.c.l.b16 %v1008
        %v1137 = vunpack.c.l.b16 %v1009
        %v1138 = vunpack.c.l.b16 %v1010
        %v1139 = vunpack.c.l.b16 %v1011
        %v1140 = vunpack.c.l.b16 %v1012
        %v1141 = vunpack.c.l.b16 %v1013
        %v1142 = vunpack.c.l.b16 %v1014
        %v1143 = vunpack.c.l.b16 %v1015
        %v1144 = vunpack.c.l.b16 %v1016
        %v1145 = vunpack.c.l.b16 %v1017
        %v1146 = vunpack.c.l.b16 %v1018
        %v1147 = vunpack.c.l.b16 %v1019
        %v1148 = vunpack.c.l.b16 %v1020
        %v1149 = vunpack.c.l.b16 %v1021
        %v1150 = vunpack.c.l.b16 %v1022
        %v1151 = vunpack.c.l.b16 %v1023
        %v1152 = vpack.c.b16 %v1137, %v1136
        %v1153 = vpack.c.b16 %v1139, %v1138
        %v1154 = vpack.c.b16 %v1141, %v1140
        %v1155 = vpack.c.b16 %v1143, %v1142
        %v1156 = vpack.c.b16 %v1145, %v1144
        %v1157 = vpack.c.b16 %v1147, %v1146
        %v1158 = vpack.c.b16 %v1149, %v1148
        %v1159 = vpack.c.b16 %v1151, %v1150
        %1168 = vmatprep.subr.bf16.mxu0 0
        %1169 = vmatpush1.bf16.msra.mxu0 %v1152
        %1170 = vmatprep.subr.bf16.mxu0 0
        %1171 = vmatpush1.bf16.msra.mxu0 %v1153
        %1172 = vmatprep.subr.bf16.mxu0 0
        %1173 = vmatpush1.bf16.msra.mxu0 %v1154
        %1174 = vmatprep.subr.bf16.mxu0 0
        %1175 = vmatpush1.bf16.msra.mxu0 %v1155
        %1176 = vmatprep.subr.bf16.mxu0 0
        %1177 = vmatpush1.bf16.msra.mxu0 %v1156
        %1178 = vmatprep.subr.bf16.mxu0 0
        %1179 = vmatpush1.bf16.msra.mxu0 %v1157
        %1180 = vmatprep.subr.bf16.mxu0 0
        %1181 = vmatpush1.bf16.msra.mxu0 %v1158
        %1182 = vmatprep.subr.bf16.mxu0 0
        %1183 = vmatpush1.bf16.msra.mxu0 %v1159
        %1184 = vmatprep.subr.bf16.mxu0 0
        %1185 = vmatpush1.bf16.msra.mxu0 0
        %1186 = vmatprep.subr.bf16.mxu0 0
        %1187 = vmatpush1.bf16.msra.mxu0 0
        %1188 = vmatprep.subr.bf16.mxu0 0
        %1189 = vmatpush1.bf16.msra.mxu0 0
        %1190 = vmatprep.subr.bf16.mxu0 0
        %1191 = vmatpush1.bf16.msra.mxu0 0
        %1192 = vmatprep.subr.bf16.mxu0 0
        %1193 = vmatpush1.bf16.msra.mxu0 0
        %1194 = vmatprep.subr.bf16.mxu0 0
        %1195 = vmatpush1.bf16.msra.mxu0 0
        %1196 = vmatprep.subr.bf16.mxu0 0
        %1197 = vmatpush1.bf16.msra.mxu0 0
        %1198 = vmatprep.subr.bf16.mxu0 0
        %1199 = vmatpush1.bf16.msra.mxu0 0
        %1200 = vmatprep.mubr.bf16.mxu0 0
        %1201 = vmatmul.mubr.bf16.gmra.mrb[0].mxu0 %v1088
        %v1202 = vpop.f32.mrb[0].mxu0
        %v1203 = vadd.f32 0.0, %v1202
        %v1204 = vpop.f32.mrb[0].mxu0
        %v1205 = vpop.f32.mrb[0].mxu0
        %v1206 = vadd.f32 0.0, %v1205
        %v1207 = vpop.f32.mrb[0].mxu0
        %1208 = vmatprep.mubr.bf16.mxu0 0
        %1209 = vmatmul.mubr.bf16.gmra.mrb[0].mxu0 %v1089
        %v1210 = vpop.f32.mrb[0].mxu0
        %v1211 = vadd.f32 0.0, %v1210
        %v1212 = vpop.f32.mrb[0].mxu0
        %v1213 = vpop.f32.mrb[0].mxu0
        %v1214 = vadd.f32 0.0, %v1213
        %v1215 = vpop.f32.mrb[0].mxu0
        %1216 = vmatprep.mubr.bf16.mxu0 0
        %1217 = vmatmul.mubr.bf16.gmra.mrb[0].mxu0 %v1090
        %v1218 = vpop.f32.mrb[0].mxu0
        %v1219 = vadd.f32 0.0, %v1218
        %v1220 = vpop.f32.mrb[0].mxu0
        %v1221 = vpop.f32.mrb[0].mxu0
        %v1222 = vadd.f32 0.0, %v1221
        %v1223 = vpop.f32.mrb[0].mxu0
        %1224 = vmatprep.mubr.bf16.mxu0 0
        %1225 = vmatmul.mubr.bf16.gmra.mrb[0].mxu0 %v1091
        %v1226 = vpop.f32.mrb[0].mxu0
        %v1227 = vadd.f32 0.0, %v1226
        %v1228 = vpop.f32.mrb[0].mxu0
        %v1229 = vpop.f32.mrb[0].mxu0
        %v1230 = vadd.f32 0.0, %v1229
        %v1231 = vpop.f32.mrb[0].mxu0
        %1232 = vmatprep.mubr.bf16.mxu0 0
        %1233 = vmatmul.mubr.bf16.gmra.mrb[0].mxu0 %v1092
        %v1234 = vpop.f32.mrb[0].mxu0
        %v1235 = vadd.f32 0.0, %v1234
        %v1236 = vpop.f32.mrb[0].mxu0
        %v1237 = vpop.f32.mrb[0].mxu0
        %v1238 = vadd.f32 0.0, %v1237
        %v1239 = vpop.f32.mrb[0].mxu0
        %1240 = vmatprep.mubr.bf16.mxu0 0
        %1241 = vmatmul.mubr.bf16.gmra.mrb[0].mxu0 %v1093
        %v1242 = vpop.f32.mrb[0].mxu0
        %v1243 = vadd.f32 0.0, %v1242
        %v1244 = vpop.f32.mrb[0].mxu0
        %v1245 = vpop.f32.mrb[0].mxu0
        %v1246 = vadd.f32 0.0, %v1245
        %v1247 = vpop.f32.mrb[0].mxu0
        %1248 = vmatprep.mubr.bf16.mxu0 0
        %1249 = vmatmul.mubr.bf16.gmra.mrb[0].mxu0 %v1094
        %v1250 = vpop.f32.mrb[0].mxu0
        %v1251 = vadd.f32 0.0, %v1250
        %v1252 = vpop.f32.mrb[0].mxu0
        %v1253 = vpop.f32.mrb[0].mxu0
        %v1254 = vadd.f32 0.0, %v1253
        %v1255 = vpop.f32.mrb[0].mxu0
        %1256 = vmatprep.mubr.bf16.mxu0 0
        %1257 = vmatmul.mubr.bf16.gmra.mrb[0].mxu0 %v1095
        %v1258 = vpop.f32.mrb[0].mxu0
        %v1259 = vadd.f32 0.0, %v1258
        %v1260 = vpop.f32.mrb[0].mxu0
        %v1261 = vpop.f32.mrb[0].mxu0
        %v1262 = vadd.f32 0.0, %v1261
        %v1263 = vpop.f32.mrb[0].mxu0
        %1264 = vmatprep.mubr.bf16.mxu0 0
        %1265 = vmatmul.mubr.bf16.gmra.mrb[0].mxu0 %v1096
        %v1266 = vpop.f32.mrb[0].mxu0
        %v1267 = vadd.f32 0.0, %v1266
        %v1268 = vpop.f32.mrb[0].mxu0
        %v1269 = vpop.f32.mrb[0].mxu0
        %v1270 = vadd.f32 0.0, %v1269
        %v1271 = vpop.f32.mrb[0].mxu0
        %1272 = vmatprep.mubr.bf16.mxu0 0
        %1273 = vmatmul.mubr.bf16.gmra.mrb[0].mxu0 %v1097
        %v1274 = vpop.f32.mrb[0].mxu0
        %v1275 = vadd.f32 0.0, %v1274
        %v1276 = vpop.f32.mrb[0].mxu0
        %v1277 = vpop.f32.mrb[0].mxu0
        %v1278 = vadd.f32 0.0, %v1277
        %v1279 = vpop.f32.mrb[0].mxu0
        %1280 = vmatprep.mubr.bf16.mxu0 0
        %1281 = vmatmul.mubr.bf16.gmra.mrb[0].mxu0 %v1098
        %v1282 = vpop.f32.mrb[0].mxu0
        %v1283 = vadd.f32 0.0, %v1282
        %v1284 = vpop.f32.mrb[0].mxu0
        %v1285 = vpop.f32.mrb[0].mxu0
        %v1286 = vadd.f32 0.0, %v1285
        %v1287 = vpop.f32.mrb[0].mxu0
        %1288 = vmatprep.mubr.bf16.mxu0 0
        %1289 = vmatmul.mubr.bf16.gmra.mrb[0].mxu0 %v1099
        %v1290 = vpop.f32.mrb[0].mxu0
        %v1291 = vadd.f32 0.0, %v1290
        %v1292 = vpop.f32.mrb[0].mxu0
        %v1293 = vpop.f32.mrb[0].mxu0
        %v1294 = vadd.f32 0.0, %v1293
        %v1295 = vpop.f32.mrb[0].mxu0
        %1296 = vmatprep.mubr.bf16.mxu0 0
        %1297 = vmatmul.mubr.bf16.gmra.mrb[0].mxu0 %v1100
        %v1298 = vpop.f32.mrb[0].mxu0
        %v1299 = vadd.f32 0.0, %v1298
        %v1300 = vpop.f32.mrb[0].mxu0
        %v1301 = vpop.f32.mrb[0].mxu0
        %v1302 = vadd.f32 0.0, %v1301
        %v1303 = vpop.f32.mrb[0].mxu0
        %1304 = vmatprep.mubr.bf16.mxu0 0
        %1305 = vmatmul.mubr.bf16.gmra.mrb[0].mxu0 %v1101
        %v1306 = vpop.f32.mrb[0].mxu0
        %v1307 = vadd.f32 0.0, %v1306
        %v1308 = vpop.f32.mrb[0].mxu0
        %v1309 = vpop.f32.mrb[0].mxu0
        %v1310 = vadd.f32 0.0, %v1309
        %v1311 = vpop.f32.mrb[0].mxu0
        %1312 = vmatprep.mubr.bf16.mxu0 0
        %1313 = vmatmul.mubr.bf16.gmra.mrb[0].mxu0 %v1102
        %v1314 = vpop.f32.mrb[0].mxu0
        %v1315 = vadd.f32 0.0, %v1314
        %v1316 = vpop.f32.mrb[0].mxu0
        %v1317 = vpop.f32.mrb[0].mxu0
        %v1318 = vadd.f32 0.0, %v1317
        %v1319 = vpop.f32.mrb[0].mxu0
        %1320 = vmatprep.mubr.bf16.mxu0 0
        %1321 = vmatmul.mubr.bf16.gmra.mrb[0].mxu0 %v1103
        %v1322 = vpop.f32.mrb[0].mxu0
        %v1323 = vadd.f32 0.0, %v1322
        %v1324 = vpop.f32.mrb[0].mxu0
        %v1325 = vpop.f32.mrb[0].mxu0
        %v1326 = vadd.f32 0.0, %v1325
        %v1327 = vpop.f32.mrb[0].mxu0
        %1328 = vdwg.mxu0
        %v1329 = vadd.f32 %v843, %v1203
        %v1330 = vadd.f32 %v846, %v1206
        %v1331 = vadd.f32 %v851, %v1211
        %v1332 = vadd.f32 %v854, %v1214
        %v1333 = vadd.f32 %v859, %v1219
        %v1334 = vadd.f32 %v862, %v1222
        %v1335 = vadd.f32 %v867, %v1227
        %v1336 = vadd.f32 %v870, %v1230
        %v1337 = vadd.f32 %v875, %v1235
        %v1338 = vadd.f32 %v878, %v1238
        %v1339 = vadd.f32 %v883, %v1243
        %v1340 = vadd.f32 %v886, %v1246
        %v1341 = vadd.f32 %v891, %v1251
        %v1342 = vadd.f32 %v894, %v1254
        %v1343 = vadd.f32 %v899, %v1259
        %v1344 = vadd.f32 %v902, %v1262
        %v1345 = vadd.f32 %v907, %v1267
        %v1346 = vadd.f32 %v910, %v1270
        %v1347 = vadd.f32 %v915, %v1275
        %v1348 = vadd.f32 %v918, %v1278
        %v1349 = vadd.f32 %v923, %v1283
        %v1350 = vadd.f32 %v926, %v1286
        %v1351 = vadd.f32 %v931, %v1291
        %v1352 = vadd.f32 %v934, %v1294
        %v1353 = vadd.f32 %v939, %v1299
        %v1354 = vadd.f32 %v942, %v1302
        %v1355 = vadd.f32 %v947, %v1307
        %v1356 = vadd.f32 %v950, %v1310
        %v1357 = vadd.f32 %v955, %v1315
        %v1358 = vadd.f32 %v958, %v1318
        %v1359 = vadd.f32 %v963, %v1323
        %v1360 = vadd.f32 %v966, %v1326
        %v1361 = vld [vmem:[%s247] sm:$0x1]
        %v1363 = vlaneseq
        %v1364 = vshrl.u32 %v1363, 7
        %v1365 = vsub.s32 0, %v1364
        %v1366 = vrot.slane %v1361, %v1365
        %v1368 = vadd.f32 %v1329, %v1366
        %v1369 = vadd.f32 %v1330, %v1366
        %v1370 = vadd.f32 %v1331, %v1366
        %v1371 = vadd.f32 %v1332, %v1366
        %v1372 = vadd.f32 %v1333, %v1366
        %v1373 = vadd.f32 %v1334, %v1366
        %v1374 = vadd.f32 %v1335, %v1366
        %v1375 = vadd.f32 %v1336, %v1366
        %v1376 = vadd.f32 %v1337, %v1366
        %v1377 = vadd.f32 %v1338, %v1366
        %v1378 = vadd.f32 %v1339, %v1366
        %v1379 = vadd.f32 %v1340, %v1366
        %v1380 = vadd.f32 %v1341, %v1366
        %v1381 = vadd.f32 %v1342, %v1366
        %v1382 = vadd.f32 %v1343, %v1366
        %v1383 = vadd.f32 %v1344, %v1366
        %v1384 = vadd.f32 %v1345, %v1366
        %v1385 = vadd.f32 %v1346, %v1366
        %v1386 = vadd.f32 %v1347, %v1366
        %v1387 = vadd.f32 %v1348, %v1366
        %v1388 = vadd.f32 %v1349, %v1366
        %v1389 = vadd.f32 %v1350, %v1366
        %v1390 = vadd.f32 %v1351, %v1366
        %v1391 = vadd.f32 %v1352, %v1366
        %v1392 = vadd.f32 %v1353, %v1366
        %v1393 = vadd.f32 %v1354, %v1366
        %v1394 = vadd.f32 %v1355, %v1366
        %v1395 = vadd.f32 %v1356, %v1366
        %v1396 = vadd.f32 %v1357, %v1366
        %v1397 = vadd.f32 %v1358, %v1366
        %v1398 = vadd.f32 %v1359, %v1366
        %v1399 = vadd.f32 %v1360, %v1366
        %vm1400 = vcmp.ge.f32.partialorder %v1368, 0.0
        %vm1401 = vcmp.ge.f32.partialorder %v1369, 0.0
        %vm1402 = vcmp.ge.f32.partialorder %v1370, 0.0
        %vm1403 = vcmp.ge.f32.partialorder %v1371, 0.0
        %vm1404 = vcmp.ge.f32.partialorder %v1372, 0.0
        %vm1405 = vcmp.ge.f32.partialorder %v1373, 0.0
        %vm1406 = vcmp.ge.f32.partialorder %v1374, 0.0
        %vm1407 = vcmp.ge.f32.partialorder %v1375, 0.0
        %vm1408 = vcmp.ge.f32.partialorder %v1376, 0.0
        %vm1409 = vcmp.ge.f32.partialorder %v1377, 0.0
        %vm1410 = vcmp.ge.f32.partialorder %v1378, 0.0
        %vm1411 = vcmp.ge.f32.partialorder %v1379, 0.0
        %vm1412 = vcmp.ge.f32.partialorder %v1380, 0.0
        %vm1413 = vcmp.ge.f32.partialorder %v1381, 0.0
        %vm1414 = vcmp.ge.f32.partialorder %v1382, 0.0
        %vm1415 = vcmp.ge.f32.partialorder %v1383, 0.0
        %vm1416 = vcmp.ge.f32.partialorder %v1384, 0.0
        %vm1417 = vcmp.ge.f32.partialorder %v1385, 0.0
        %vm1418 = vcmp.ge.f32.partialorder %v1386, 0.0
        %vm1419 = vcmp.ge.f32.partialorder %v1387, 0.0
        %vm1420 = vcmp.ge.f32.partialorder %v1388, 0.0
        %vm1421 = vcmp.ge.f32.partialorder %v1389, 0.0
        %vm1422 = vcmp.ge.f32.partialorder %v1390, 0.0
        %vm1423 = vcmp.ge.f32.partialorder %v1391, 0.0
        %vm1424 = vcmp.ge.f32.partialorder %v1392, 0.0
        %vm1425 = vcmp.ge.f32.partialorder %v1393, 0.0
        %vm1426 = vcmp.ge.f32.partialorder %v1394, 0.0
        %vm1427 = vcmp.ge.f32.partialorder %v1395, 0.0
        %vm1428 = vcmp.ge.f32.partialorder %v1396, 0.0
        %vm1429 = vcmp.ge.f32.partialorder %v1397, 0.0
        %vm1430 = vcmp.ge.f32.partialorder %v1398, 0.0
        %vm1431 = vcmp.ge.f32.partialorder %v1399, 0.0
        %v1432 = vmul.f32 %v1368, 0.1
        %v1433 = vmul.f32 %v1369, 0.1
        %v1434 = vmul.f32 %v1370, 0.1
        %v1435 = vmul.f32 %v1371, 0.1
        %v1436 = vmul.f32 %v1372, 0.1
        %v1437 = vmul.f32 %v1373, 0.1
        %v1438 = vmul.f32 %v1374, 0.1
        %v1439 = vmul.f32 %v1375, 0.1
        %v1440 = vmul.f32 %v1376, 0.1
        %v1441 = vmul.f32 %v1377, 0.1
        %v1442 = vmul.f32 %v1378, 0.1
        %v1443 = vmul.f32 %v1379, 0.1
        %v1444 = vmul.f32 %v1380, 0.1
        %v1445 = vmul.f32 %v1381, 0.1
        %v1446 = vmul.f32 %v1382, 0.1
        %v1447 = vmul.f32 %v1383, 0.1
        %v1448 = vmul.f32 %v1384, 0.1
        %v1449 = vmul.f32 %v1385, 0.1
        %v1450 = vmul.f32 %v1386, 0.1
        %v1451 = vmul.f32 %v1387, 0.1
        %v1452 = vmul.f32 %v1388, 0.1
        %v1453 = vmul.f32 %v1389, 0.1
        %v1454 = vmul.f32 %v1390, 0.1
        %v1455 = vmul.f32 %v1391, 0.1
        %v1456 = vmul.f32 %v1392, 0.1
        %v1457 = vmul.f32 %v1393, 0.1
        %v1458 = vmul.f32 %v1394, 0.1
        %v1459 = vmul.f32 %v1395, 0.1
        %v1460 = vmul.f32 %v1396, 0.1
        %v1461 = vmul.f32 %v1397, 0.1
        %v1462 = vmul.f32 %v1398, 0.1
        %v1463 = vmul.f32 %v1399, 0.1
        %v1464 = vsel %vm1400, %v1368, %v1432
        %v1465 = vsel %vm1401, %v1369, %v1433
        %v1466 = vsel %vm1402, %v1370, %v1434
        %v1467 = vsel %vm1403, %v1371, %v1435
        %v1468 = vsel %vm1404, %v1372, %v1436
        %v1469 = vsel %vm1405, %v1373, %v1437
        %v1470 = vsel %vm1406, %v1374, %v1438
        %v1471 = vsel %vm1407, %v1375, %v1439
        %v1472 = vsel %vm1408, %v1376, %v1440
        %v1473 = vsel %vm1409, %v1377, %v1441
        %v1474 = vsel %vm1410, %v1378, %v1442
        %v1475 = vsel %vm1411, %v1379, %v1443
        %v1476 = vsel %vm1412, %v1380, %v1444
        %v1477 = vsel %vm1413, %v1381, %v1445
        %v1478 = vsel %vm1414, %v1382, %v1446
        %v1479 = vsel %vm1415, %v1383, %v1447
        %v1480 = vsel %vm1416, %v1384, %v1448
        %v1481 = vsel %vm1417, %v1385, %v1449
        %v1482 = vsel %vm1418, %v1386, %v1450
        %v1483 = vsel %vm1419, %v1387, %v1451
        %v1484 = vsel %vm1420, %v1388, %v1452
        %v1485 = vsel %vm1421, %v1389, %v1453
        %v1486 = vsel %vm1422, %v1390, %v1454
        %v1487 = vsel %vm1423, %v1391, %v1455
        %v1488 = vsel %vm1424, %v1392, %v1456
        %v1489 = vsel %vm1425, %v1393, %v1457
        %v1490 = vsel %vm1426, %v1394, %v1458
        %v1491 = vsel %vm1427, %v1395, %v1459
        %v1492 = vsel %vm1428, %v1396, %v1460
        %v1493 = vsel %vm1429, %v1397, %v1461
        %v1494 = vsel %vm1430, %v1398, %v1462
        %v1495 = vsel %vm1431, %v1399, %v1463
        %v1496 = vpack.c.bf16 %v1465, %v1464
        %v1497 = vpack.c.bf16 %v1467, %v1466
        %v1498 = vpack.c.bf16 %v1469, %v1468
        %v1499 = vpack.c.bf16 %v1471, %v1470
        %v1500 = vpack.c.bf16 %v1473, %v1472
        %v1501 = vpack.c.bf16 %v1475, %v1474
        %v1502 = vpack.c.bf16 %v1477, %v1476
        %v1503 = vpack.c.bf16 %v1479, %v1478
        %v1504 = vpack.c.bf16 %v1481, %v1480
        %v1505 = vpack.c.bf16 %v1483, %v1482
        %v1506 = vpack.c.bf16 %v1485, %v1484
        %v1507 = vpack.c.bf16 %v1487, %v1486
        %v1508 = vpack.c.bf16 %v1489, %v1488
        %v1509 = vpack.c.bf16 %v1491, %v1490
        %v1510 = vpack.c.bf16 %v1493, %v1492
        %v1511 = vpack.c.bf16 %v1495, %v1494
        %v1528 = vunpack.c.l.b16 %v1496
        %v1529 = vunpack.c.h.b16 %v1496
        %v1530 = vunpack.c.l.b16 %v1497
        %v1531 = vunpack.c.h.b16 %v1497
        %v1532 = vunpack.c.l.b16 %v1498
        %v1533 = vunpack.c.h.b16 %v1498
        %v1534 = vunpack.c.l.b16 %v1499
        %v1535 = vunpack.c.h.b16 %v1499
        %v1536 = vunpack.c.l.b16 %v1500
        %v1537 = vunpack.c.h.b16 %v1500
        %v1538 = vunpack.c.l.b16 %v1501
        %v1539 = vunpack.c.h.b16 %v1501
        %v1540 = vunpack.c.l.b16 %v1502
        %v1541 = vunpack.c.h.b16 %v1502
        %v1542 = vunpack.c.l.b16 %v1503
        %v1543 = vunpack.c.h.b16 %v1503
        %v1544 = vunpack.c.l.b16 %v1504
        %v1545 = vunpack.c.h.b16 %v1504
        %v1546 = vunpack.c.l.b16 %v1505
        %v1547 = vunpack.c.h.b16 %v1505
        %v1548 = vunpack.c.l.b16 %v1506
        %v1549 = vunpack.c.h.b16 %v1506
        %v1550 = vunpack.c.l.b16 %v1507
        %v1551 = vunpack.c.h.b16 %v1507
        %v1552 = vunpack.c.l.b16 %v1508
        %v1553 = vunpack.c.h.b16 %v1508
        %v1554 = vunpack.c.l.b16 %v1509
        %v1555 = vunpack.c.h.b16 %v1509
        %v1556 = vunpack.c.l.b16 %v1510
        %v1557 = vunpack.c.h.b16 %v1510
        %v1558 = vunpack.c.l.b16 %v1511
        %v1559 = vunpack.c.h.b16 %v1511
        %v1560 = vpack.c.b16 %v1528, %v1528
        %v1561 = vpack.c.b16 %v1529, %v1529
        %v1562 = vpack.c.b16 %v1530, %v1530
        %v1563 = vpack.c.b16 %v1531, %v1531
        %v1564 = vpack.c.b16 %v1532, %v1532
        %v1565 = vpack.c.b16 %v1533, %v1533
        %v1566 = vpack.c.b16 %v1534, %v1534
        %v1567 = vpack.c.b16 %v1535, %v1535
        %v1568 = vpack.c.b16 %v1536, %v1536
        %v1569 = vpack.c.b16 %v1537, %v1537
        %v1570 = vpack.c.b16 %v1538, %v1538
        %v1571 = vpack.c.b16 %v1539, %v1539
        %v1572 = vpack.c.b16 %v1540, %v1540
        %v1573 = vpack.c.b16 %v1541, %v1541
        %v1574 = vpack.c.b16 %v1542, %v1542
        %v1575 = vpack.c.b16 %v1543, %v1543
        %v1576 = vpack.c.b16 %v1544, %v1544
        %v1577 = vpack.c.b16 %v1545, %v1545
        %v1578 = vpack.c.b16 %v1546, %v1546
        %v1579 = vpack.c.b16 %v1547, %v1547
        %v1580 = vpack.c.b16 %v1548, %v1548
        %v1581 = vpack.c.b16 %v1549, %v1549
        %v1582 = vpack.c.b16 %v1550, %v1550
        %v1583 = vpack.c.b16 %v1551, %v1551
        %v1584 = vpack.c.b16 %v1552, %v1552
        %v1585 = vpack.c.b16 %v1553, %v1553
        %v1586 = vpack.c.b16 %v1554, %v1554
        %v1587 = vpack.c.b16 %v1555, %v1555
        %v1588 = vpack.c.b16 %v1556, %v1556
        %v1589 = vpack.c.b16 %v1557, %v1557
        %v1590 = vpack.c.b16 %v1558, %v1558
        %v1591 = vpack.c.b16 %v1559, %v1559
        %1624 = vst [vmem:[%s244] sm:$0xf] %v1560
        %1625 = vst [vmem:[%s244 + $0x4] sm:$0xf] %v1561
        %1626 = vst [vmem:[%s244 + $0x8] sm:$0xf] %v1562
        %1627 = vst [vmem:[%s244 + $0xc] sm:$0xf] %v1563
        %1628 = vst [vmem:[%s244 + $0x10] sm:$0xf] %v1564
        %1629 = vst [vmem:[%s244 + $0x14] sm:$0xf] %v1565
        %1630 = vst [vmem:[%s244 + $0x18] sm:$0xf] %v1566
        %1631 = vst [vmem:[%s244 + $0x1c] sm:$0xf] %v1567
        %1632 = vst [vmem:[%s244 + $0x20] sm:$0xf] %v1568
        %1633 = vst [vmem:[%s244 + $0x24] sm:$0xf] %v1569
        %1634 = vst [vmem:[%s244 + $0x28] sm:$0xf] %v1570
        %1635 = vst [vmem:[%s244 + $0x2c] sm:$0xf] %v1571
        %1636 = vst [vmem:[%s244 + $0x30] sm:$0xf] %v1572
        %1637 = vst [vmem:[%s244 + $0x34] sm:$0xf] %v1573
        %1638 = vst [vmem:[%s244 + $0x38] sm:$0xf] %v1574
        %1639 = vst [vmem:[%s244 + $0x3c] sm:$0xf] %v1575
        %1640 = vst [vmem:[%s244 + $0x40] sm:$0xf] %v1576
        %1641 = vst [vmem:[%s244 + $0x44] sm:$0xf] %v1577
        %1642 = vst [vmem:[%s244 + $0x48] sm:$0xf] %v1578
        %1643 = vst [vmem:[%s244 + $0x4c] sm:$0xf] %v1579
        %1644 = vst [vmem:[%s244 + $0x50] sm:$0xf] %v1580
        %1645 = vst [vmem:[%s244 + $0x54] sm:$0xf] %v1581
        %1646 = vst [vmem:[%s244 + $0x58] sm:$0xf] %v1582
        %1647 = vst [vmem:[%s244 + $0x5c] sm:$0xf] %v1583
        %1648 = vst [vmem:[%s244 + $0x60] sm:$0xf] %v1584
        %1649 = vst [vmem:[%s244 + $0x64] sm:$0xf] %v1585
        %1650 = vst [vmem:[%s244 + $0x68] sm:$0xf] %v1586
        %1651 = vst [vmem:[%s244 + $0x6c] sm:$0xf] %v1587
        %1652 = vst [vmem:[%s244 + $0x70] sm:$0xf] %v1588
        %1653 = vst [vmem:[%s244 + $0x74] sm:$0xf] %v1589
        %1654 = vst [vmem:[%s244 + $0x78] sm:$0xf] %v1590
        %1655 = vst [vmem:[%s244 + $0x7c] sm:$0xf] %v1591
        %s1656 = sand.u32 %s130, 1
        %s1657 = scalar_lea.sflag [#allocation4], %s1656
        %s1658 = sand.u32 %s130, 1
        %s1659 = smul.addr %s1658, 128
        %s1660 = scalar_lea.vmem [#allocation7], %s1659
        // Predicated region
        $region41: #{tpu_custom_call.1} parent=31 // pred_check
          %p1661 = pneg %p140
        $region42: #{tpu_custom_call.1} parent=31 // pred_check_branch
          %1663 = sbr.rel (%p1661) target = $region44
        $region43: #{tpu_custom_call.1} parent=31 // pred_region
          %s1664 = smul.u32 32, %s27
          %s1666 = ssub.s32 2048, 2048
          %1667 = vsyncadd %s1657, %s1666
          %s1668 = sadd.s32 %s28, %s1664
          %s1669 = smul.addr %s26, 32
          %s1670 = sadd.s32 %s1668, %s1669
          %s1671 = smul.addr %s1670, 64
          %s1672 = scalar_lea.hbm %s3, %s1671
          %s1673 = sshll.u32 %s1660, 4
          %s1674 = int_to_ptr.vmem [resolvable:$true] %s1673
          %1679 = dma.vmem_to_hbm [thread:$0]  %s1674, 2048, %s1672, %s1657, 64, 64, 4
        $region44: #{tpu_custom_call.1} parent=31 // pred_fallthru
          _
      $region32: #{tpu_custom_call.1} parent=5 // pred_fallthru
        _
      %p1680 = scmp.le.s32.totalorder 2, %s16
      // Predicated region
      $region45: #{tpu_custom_call.1} parent=5 // pred_check
        %p1681 = pneg %p1680
      $region46: #{tpu_custom_call.1} parent=5 // pred_check_branch
        %1683 = sbr.rel (%p1681) target = $region48
      $region47: #{tpu_custom_call.1} parent=5 // pred_region
        %s1684 = ssub.s32 %s16, 2
        // Predicated region
        $region49: #{tpu_custom_call.1} parent=47 // pred_check
          %p1685 = pneg %p146
        $region50: #{tpu_custom_call.1} parent=47 // pred_check_branch
          %1687 = sbr.rel (%p1685) target = $region52
        $region51: #{tpu_custom_call.1} parent=47 // pred_region
          %s1688 = sand.u32 %s131, 1
          %s1689 = scalar_lea.sflag [#allocation4], %s1688
          %s1690 = sand.u32 %s131, 1
          %s1691 = smul.addr %s1690, 128
          %s1692 = scalar_lea.vmem [#allocation7], %s1691
          %1693 = dma.done %s1689, 2048
        $region52: #{tpu_custom_call.1} parent=47 // pred_fallthru
          _
      $region48: #{tpu_custom_call.1} parent=5 // pred_fallthru
        _
    $region6: #{tpu_custom_call.1} parent=1 // loop_footer
      %s20 = sadd.s32 1, %s16
    $region7: #{tpu_custom_call.1} parent=1 // loop_footer_branch
      %15 = sbr.rel target = $region3
    $region8: #{tpu_custom_call.1} parent=1 // loop_exit
      _
    %1694 = vsyncpa [#allocation3], 1
    %s1695 = scalar_lea.sflag [#allocation3], 1
    %1696 = vsyncpa %s1695, 1
    %1697 = vsyncpa [#allocation6], 1
    %1698 = vsyncpa [#allocation4], 1
    %s1699 = scalar_lea.sflag [#allocation4], 1
    %1700 = vsyncpa %s1699, 1

</llo_original>
